<compile_context>
chip_gen: v6e
topology: v6e:2x2x1
jax: 0.10.0
libtpu: 0.0.40
codegen_flags: <defaults>
</compile_context>

<pallas_src>
import functools

import jax
import jax.numpy as jnp
import numpy as np
from jax import lax
from jax.experimental import pallas as pl
from jax.experimental.pallas import tpu as pltpu


def _gat_kernel(x_ref, adj_ref, wqkv_ref, bqkv_ref, wo_ref, bo_ref, out_ref,
                *, block_b, num_nodes, hidden_dim, num_heads, head_dim):
    N, H, hd = num_nodes, hidden_dim, head_dim

    # Fused QKV projection over all rows of the block: (block_b*N, 3H).
    x = x_ref[...]
    qkv = jnp.dot(x, wqkv_ref[...], preferred_element_type=jnp.float32) + bqkv_ref[...]
    q_all = qkv[:, 0:H]
    k_all = qkv[:, H:2 * H]
    v_all = qkv[:, 2 * H:3 * H]

    # Hoisted iotas (built once per grid step).
    row = lax.broadcasted_iota(jnp.int32, (N, N), 0)
    col = lax.broadcasted_iota(jnp.int32, (N, N), 1)
    diag = row == col
    lane = lax.broadcasted_iota(jnp.int32, (1, H), 1)

    scale = 1.0 / (hd ** 0.5)
    neg_big = jnp.float32(-1e30)

    agg_rows = []
    for b in range(block_b):                       # small static batch-in-block loop
        r0 = b * N
        q_b = q_all[r0:r0 + N, :] * scale          # fold 1/sqrt(hd) into Q once
        k_b = k_all[r0:r0 + N, :]
        v_b = v_all[r0:r0 + N, :]
        adj_b = adj_ref[b]                         # (N, N) int8 connectivity
        connected = (adj_b != 0) | diag            # self-loops always connected

        def head_body(h, agg_b):
            head_mask = ((lane >= h * hd) & (lane < (h + 1) * hd)).astype(jnp.float32)
            # Masked-K contraction over full H == q_h . k_h^T (cross-head terms are 0).
            s = lax.dot_general(q_b, k_b * head_mask,
                                (((1,), (1,)), ((), ())),
                                preferred_element_type=jnp.float32)
            s = jnp.where(connected, s, neg_big)   # masked_fill
            s = jnp.where(s >= 0, s, 0.2 * s)      # LeakyReLU(0.2)
            s = s - jnp.max(s, axis=-1, keepdims=True)
            p = jnp.exp(s)
            denom = jnp.sum(p, axis=-1, keepdims=True)
            inv = pl.reciprocal(denom, approx=True)
            inv = inv * (2.0 - denom * inv)        # one Newton step -> ~f32 accuracy
            p = p * inv
            # Head output lands directly in its column range; sum == concat.
            return agg_b + jnp.dot(p, v_b * head_mask,
                                   preferred_element_type=jnp.float32)

        agg_b = lax.fori_loop(0, num_heads, head_body,
                              jnp.zeros((N, H), jnp.float32), unroll=True)
        agg_rows.append(agg_b)

    agg = agg_rows[0] if block_b == 1 else jnp.concatenate(agg_rows, axis=0)
    out = jnp.dot(agg, wo_ref[...], preferred_element_type=jnp.float32) + bo_ref[...]
    out_ref[...] = out.astype(out_ref.dtype)


def _pick_block_b(B, N, max_rows=256):
    """Largest batch fold that keeps rows MXU-aligned, <= max_rows, and (when
    possible) >= 2 grid steps so both v7x TensorCores are used."""
    best = None
    for bb in range(1, B + 1):
        if B % bb or (bb * N) % 8 or bb * N > max_rows:
            continue
        if B // bb >= 2 or B == 1:
            best = bb
    return best if best is not None else B


def multi_head_gat_pallas(node_features, adjacency, params, num_heads, block_b=None):
    B, N, H = node_features.shape
    head_dim = H // num_heads
    if block_b is None:
        block_b = _pick_block_b(B, N)
    assert B % block_b == 0
    M = block_b * N

    # Lane-flat node features / output: (B*N, H) blocks, no in-kernel reshapes.
    x_flat = node_features.reshape(B * N, H).astype(jnp.float32)
    # Adjacency is only ever used as connectivity -> ship as int8 (4x less DMA).
    adj_i8 = (adjacency != 0).astype(jnp.int8)

    # Fused QKV weights (PyTorch Linear: y = x @ W.T + b) and output projection.
    wqkv = jnp.concatenate(
        [params["wq"].T, params["wk"].T, params["wv"].T], axis=1)       # (H, 3H)
    bqkv = jnp.concatenate(
        [params["bq"], params["bk"], params["bv"]]).reshape(1, 3 * H)   # (1, 3H)
    wo_t = params["wo"].T                                               # (H, H)
    bo = params["bo"].reshape(1, H)

    kernel = functools.partial(
        _gat_kernel, block_b=block_b, num_nodes=N, hidden_dim=H,
        num_heads=num_heads, head_dim=head_dim)

    out_flat = pl.pallas_call(
        kernel,
        out_shape=jax.ShapeDtypeStruct((B * N, H), jnp.float32),
        grid=(B // block_b,),
        in_specs=[
            pl.BlockSpec((M, H), lambda i: (i, 0)),            # node features (flat)
            pl.BlockSpec((block_b, N, N), lambda i: (i, 0, 0)),  # adjacency (int8)
            pl.BlockSpec((H, 3 * H), lambda i: (0, 0)),        # fused Wqkv^T
            pl.BlockSpec((1, 3 * H), lambda i: (0, 0)),        # fused bqkv
            pl.BlockSpec((H, H), lambda i: (0, 0)),            # Wo^T
            pl.BlockSpec((1, H), lambda i: (0, 0)),            # bo
        ],
        out_specs=pl.BlockSpec((M, H), lambda i: (i, 0)),
        compiler_params=pltpu.CompilerParams(
            dimension_semantics=("parallel",)),
    )(x_flat, adj_i8, wqkv, bqkv, wo_t, bo)

    return out_flat.reshape(B, N, H)


def multi_head_gat_ref(node_features, adjacency, params, num_heads):
    """Pure-JAX reference mirroring the PyTorch forward (dropout in eval)."""
    B, N, H = node_features.shape
    hd = H // num_heads
    eye = jnp.eye(N, dtype=adjacency.dtype)[None]
    adj_sl = adjacency + eye
    adj_norm = adj_sl / adj_sl.sum(-1, keepdims=True)

    def lin(x, w, b):
        return x @ w.T + b

    q = lin(node_features, params["wq"], params["bq"]).reshape(B, N, num_heads, hd).transpose(0, 2, 1, 3)
    k = lin(node_features, params["wk"], params["bk"]).reshape(B, N, num_heads, hd).transpose(0, 2, 1, 3)
    v = lin(node_features, params["wv"], params["bv"]).reshape(B, N, num_heads, hd).transpose(0, 2, 1, 3)

    s = jnp.einsum("bhid,bhjd->bhij", q, k) / (hd ** 0.5)
    s = jnp.where(adj_norm[:, None] == 0, -jnp.inf, s)
    s = jnp.where(s >= 0, s, 0.2 * s)
    w = jax.nn.softmax(s, axis=-1)
    agg = jnp.einsum("bhij,bhjd->bhid", w, v)
    agg = agg.transpose(0, 2, 1, 3).reshape(B, N, H)
    return lin(agg, params["wo"], params["bo"])


if __name__ == "__main__":
    B, N, H, NUM_HEADS = 2, 16, 32, 4

    key = jax.random.PRNGKey(0)
    keys = jax.random.split(key, 12)

    # deterministic synthetic parameters (PyTorch Linear: weight (out, in), bias (out,))
    scale = 1.0 / np.sqrt(H)
    params = {
        "wq": jax.random.uniform(keys[0], (H, H), jnp.float32, -scale, scale),
        "bq": jax.random.uniform(keys[1], (H,), jnp.float32, -scale, scale),
        "wk": jax.random.uniform(keys[2], (H, H), jnp.float32, -scale, scale),
        "bk": jax.random.uniform(keys[3], (H,), jnp.float32, -scale, scale),
        "wv": jax.random.uniform(keys[4], (H, H), jnp.float32, -scale, scale),
        "bv": jax.random.uniform(keys[5], (H,), jnp.float32, -scale, scale),
        "wo": jax.random.uniform(keys[6], (H, H), jnp.float32, -scale, scale),
        "bo": jax.random.uniform(keys[7], (H,), jnp.float32, -scale, scale),
    }

    node_features = jax.random.normal(keys[8], (B, N, H), jnp.float32)
    adjacency = jax.random.bernoulli(keys[9], 0.4, (B, N, N)).astype(jnp.float32)

    out = multi_head_gat_pallas(node_features, adjacency, params, NUM_HEADS)
    out = jax.block_until_ready(out)

    ref = multi_head_gat_ref(node_features, adjacency, params, NUM_HEADS)
    np.testing.assert_allclose(np.asarray(out), np.asarray(ref), rtol=1e-4, atol=1e-4)

    print("KERNEL_OK")
</pallas_src>

<mosaic_0001>
module attributes {stable_mosaic.version = 11 : i64} {
  func.func @_gat_kernel(%arg0: i32, %arg1: memref<16x32xf32, #tpu.memory_space<vmem>>, %arg2: memref<1x16x16xi8, #tpu.memory_space<vmem>>, %arg3: memref<32x96xf32, #tpu.memory_space<vmem>>, %arg4: memref<1x96xf32, #tpu.memory_space<vmem>>, %arg5: memref<32x32xf32, #tpu.memory_space<vmem>>, %arg6: memref<1x32xf32, #tpu.memory_space<vmem>>, %arg7: memref<16x32xf32, #tpu.memory_space<vmem>>) attributes {dimension_semantics = [#tpu.dimension_semantics<parallel>], iteration_bounds = array<i64: 2>, scalar_prefetch = 0 : i64, scratch_operands = 0 : i64, tpu.core_type = #tpu.core_type<tc>, window_params = [{transform_indices = @transform_0, window_bounds = array<i64: 16, 32>}, {transform_indices = @transform_1, window_bounds = array<i64: 1, 16, 16>}, {pipeline_mode = #tpu.pipeline_mode<synchronous>, transform_indices = @transform_2, window_bounds = array<i64: 32, 96>}, {pipeline_mode = #tpu.pipeline_mode<synchronous>, transform_indices = @transform_3, window_bounds = array<i64: 1, 96>}, {pipeline_mode = #tpu.pipeline_mode<synchronous>, transform_indices = @transform_4, window_bounds = array<i64: 32, 32>}, {pipeline_mode = #tpu.pipeline_mode<synchronous>, transform_indices = @transform_5, window_bounds = array<i64: 1, 32>}, {transform_indices = @transform_6, window_bounds = array<i64: 16, 32>}]} {
    %c0 = arith.constant 0 : index
    %c0_0 = arith.constant 0 : index
    %0 = vector.load %arg1[%c0, %c0_0] : memref<16x32xf32, #tpu.memory_space<vmem>>, vector<16x32xf32>
    %c0_1 = arith.constant 0 : index
    %c0_2 = arith.constant 0 : index
    %1 = vector.load %arg3[%c0_1, %c0_2] : memref<32x96xf32, #tpu.memory_space<vmem>>, vector<32x96xf32>
    %cst = arith.constant dense<0.000000e+00> : vector<16x96xf32>
    %2 = tpu.matmul %0, %1, %cst {dimension_numbers = #tpu.dot_dimension_numbers<[1], [0], [0], [1], [0, 0, 1, 1], [], []>} : vector<16x32xf32>, vector<32x96xf32>, vector<16x96xf32> -> vector<16x96xf32>
    %c0_3 = arith.constant 0 : index
    %c0_4 = arith.constant 0 : index
    %3 = vector.load %arg4[%c0_3, %c0_4] : memref<1x96xf32, #tpu.memory_space<vmem>>, vector<1x96xf32>
    %4 = vector.broadcast %3 : vector<1x96xf32> to vector<16x96xf32>
    %5 = arith.addf %2, %4 : vector<16x96xf32>
    %6 = vector.extract_strided_slice %5 {offsets = [0, 0], sizes = [16, 32], strides = [1, 1]} : vector<16x96xf32> to vector<16x32xf32>
    %7 = vector.extract_strided_slice %5 {offsets = [0, 32], sizes = [16, 32], strides = [1, 1]} : vector<16x96xf32> to vector<16x32xf32>
    %8 = vector.extract_strided_slice %5 {offsets = [0, 64], sizes = [16, 32], strides = [1, 1]} : vector<16x96xf32> to vector<16x32xf32>
    %9 = tpu.iota {dimensions = array<i32: 0>} : vector<16x16xi32>
    %10 = tpu.iota {dimensions = array<i32: 1>} : vector<16x16xi32>
    %11 = arith.cmpi eq, %9, %10 : vector<16x16xi32>
    %12 = tpu.iota {dimensions = array<i32: 1>} : vector<1x32xi32>
    %cst_5 = arith.constant 0.353553385 : f32
    %13 = vector.broadcast %cst_5 : f32 to vector<16x32xf32>
    %14 = arith.mulf %6, %13 : vector<16x32xf32>
    %c0_6 = arith.constant 0 : index
    %c0_7 = arith.constant 0 : index
    %c0_8 = arith.constant 0 : index
    %15 = vector.load %arg2[%c0_6, %c0_7, %c0_8] : memref<1x16x16xi8, #tpu.memory_space<vmem>>, vector<1x16x16xi8>
    %16 = vector.shape_cast %15 : vector<1x16x16xi8> to vector<16x16xi8>
    %c0_i8 = arith.constant 0 : i8
    %17 = vector.broadcast %c0_i8 : i8 to vector<16x16xi8>
    %18 = arith.cmpi ne, %16, %17 : vector<16x16xi8>
    %19 = arith.ori %18, %11 : vector<16x16xi1>
    %cst_9 = arith.constant 0.000000e+00 : f32
    %20 = vector.broadcast %cst_9 : f32 to vector<16x32xf32>
    %cst_10 = arith.constant -1.000000e+30 : f32
    %c0_i32 = arith.constant 0 : i32
    %c8_i32 = arith.constant 8 : i32
    %21 = arith.muli %c0_i32, %c8_i32 : i32
    %22 = vector.broadcast %21 : i32 to vector<1x32xi32>
    %23 = arith.cmpi sge, %12, %22 : vector<1x32xi32>
    %c1_i32 = arith.constant 1 : i32
    %24 = arith.addi %c0_i32, %c1_i32 : i32
    %c8_i32_11 = arith.constant 8 : i32
    %25 = arith.muli %24, %c8_i32_11 : i32
    %26 = vector.broadcast %25 : i32 to vector<1x32xi32>
    %27 = arith.cmpi slt, %12, %26 : vector<1x32xi32>
    %28 = arith.andi %23, %27 : vector<1x32xi1>
    %29 = arith.extui %28 : vector<1x32xi1> to vector<1x32xi32>
    %30 = arith.sitofp %29 : vector<1x32xi32> to vector<1x32xf32>
    %31 = vector.broadcast %30 : vector<1x32xf32> to vector<16x32xf32>
    %32 = arith.mulf %7, %31 : vector<16x32xf32>
    %cst_12 = arith.constant dense<0.000000e+00> : vector<16x16xf32>
    %33 = tpu.matmul %14, %32, %cst_12 {dimension_numbers = #tpu.dot_dimension_numbers<[1], [1], [0], [0], [0, 0, 1, 0], [], []>} : vector<16x32xf32>, vector<16x32xf32>, vector<16x16xf32> -> vector<16x16xf32>
    %34 = vector.broadcast %cst_10 : f32 to vector<16x16xf32>
    %35 = arith.select %19, %33, %34 : vector<16x16xi1>, vector<16x16xf32>
    %cst_13 = arith.constant 0.000000e+00 : f32
    %36 = vector.broadcast %cst_13 : f32 to vector<16x16xf32>
    %37 = arith.cmpf oge, %35, %36 : vector<16x16xf32>
    %cst_14 = arith.constant 2.000000e-01 : f32
    %38 = vector.broadcast %cst_14 : f32 to vector<16x16xf32>
    %39 = arith.mulf %38, %35 : vector<16x16xf32>
    %40 = arith.select %37, %35, %39 : vector<16x16xi1>, vector<16x16xf32>
    %cst_15 = arith.constant dense<0xFF800000> : vector<16xf32>
    %41 = vector.multi_reduction <maximumf>, %40, %cst_15 [1] : vector<16x16xf32> to vector<16xf32>
    %42 = vector.shape_cast %41 : vector<16xf32> to vector<16x1xf32>
    %43 = vector.broadcast %42 : vector<16x1xf32> to vector<16x16xf32>
    %44 = arith.subf %40, %43 : vector<16x16xf32>
    %45 = math.exp %44 : vector<16x16xf32>
    %cst_16 = arith.constant dense<0.000000e+00> : vector<16xf32>
    %46 = vector.multi_reduction <add>, %45, %cst_16 [1] : vector<16x16xf32> to vector<16xf32>
    %47 = vector.shape_cast %46 : vector<16xf32> to vector<16x1xf32>
    %48 = tpu.reciprocal %47 {approx = true} : vector<16x1xf32> -> vector<16x1xf32>
    %49 = arith.mulf %47, %48 : vector<16x1xf32>
    %cst_17 = arith.constant 2.000000e+00 : f32
    %50 = vector.broadcast %cst_17 : f32 to vector<16x1xf32>
    %51 = arith.subf %50, %49 : vector<16x1xf32>
    %52 = arith.mulf %48, %51 : vector<16x1xf32>
    %53 = vector.broadcast %52 : vector<16x1xf32> to vector<16x16xf32>
    %54 = arith.mulf %45, %53 : vector<16x16xf32>
    %55 = vector.broadcast %30 : vector<1x32xf32> to vector<16x32xf32>
    %56 = arith.mulf %8, %55 : vector<16x32xf32>
    %cst_18 = arith.constant dense<0.000000e+00> : vector<16x32xf32>
    %57 = tpu.matmul %54, %56, %cst_18 {dimension_numbers = #tpu.dot_dimension_numbers<[1], [0], [0], [1], [0, 0, 1, 1], [], []>} : vector<16x16xf32>, vector<16x32xf32>, vector<16x32xf32> -> vector<16x32xf32>
    %58 = arith.addf %20, %57 : vector<16x32xf32>
    %c1_i32_19 = arith.constant 1 : i32
    %c8_i32_20 = arith.constant 8 : i32
    %59 = arith.muli %c1_i32_19, %c8_i32_20 : i32
    %60 = vector.broadcast %59 : i32 to vector<1x32xi32>
    %61 = arith.cmpi sge, %12, %60 : vector<1x32xi32>
    %c1_i32_21 = arith.constant 1 : i32
    %62 = arith.addi %c1_i32_19, %c1_i32_21 : i32
    %c8_i32_22 = arith.constant 8 : i32
    %63 = arith.muli %62, %c8_i32_22 : i32
    %64 = vector.broadcast %63 : i32 to vector<1x32xi32>
    %65 = arith.cmpi slt, %12, %64 : vector<1x32xi32>
    %66 = arith.andi %61, %65 : vector<1x32xi1>
    %67 = arith.extui %66 : vector<1x32xi1> to vector<1x32xi32>
    %68 = arith.sitofp %67 : vector<1x32xi32> to vector<1x32xf32>
    %69 = vector.broadcast %68 : vector<1x32xf32> to vector<16x32xf32>
    %70 = arith.mulf %7, %69 : vector<16x32xf32>
    %cst_23 = arith.constant dense<0.000000e+00> : vector<16x16xf32>
    %71 = tpu.matmul %14, %70, %cst_23 {dimension_numbers = #tpu.dot_dimension_numbers<[1], [1], [0], [0], [0, 0, 1, 0], [], []>} : vector<16x32xf32>, vector<16x32xf32>, vector<16x16xf32> -> vector<16x16xf32>
    %72 = vector.broadcast %cst_10 : f32 to vector<16x16xf32>
    %73 = arith.select %19, %71, %72 : vector<16x16xi1>, vector<16x16xf32>
    %cst_24 = arith.constant 0.000000e+00 : f32
    %74 = vector.broadcast %cst_24 : f32 to vector<16x16xf32>
    %75 = arith.cmpf oge, %73, %74 : vector<16x16xf32>
    %cst_25 = arith.constant 2.000000e-01 : f32
    %76 = vector.broadcast %cst_25 : f32 to vector<16x16xf32>
    %77 = arith.mulf %76, %73 : vector<16x16xf32>
    %78 = arith.select %75, %73, %77 : vector<16x16xi1>, vector<16x16xf32>
    %cst_26 = arith.constant dense<0xFF800000> : vector<16xf32>
    %79 = vector.multi_reduction <maximumf>, %78, %cst_26 [1] : vector<16x16xf32> to vector<16xf32>
    %80 = vector.shape_cast %79 : vector<16xf32> to vector<16x1xf32>
    %81 = vector.broadcast %80 : vector<16x1xf32> to vector<16x16xf32>
    %82 = arith.subf %78, %81 : vector<16x16xf32>
    %83 = math.exp %82 : vector<16x16xf32>
    %cst_27 = arith.constant dense<0.000000e+00> : vector<16xf32>
    %84 = vector.multi_reduction <add>, %83, %cst_27 [1] : vector<16x16xf32> to vector<16xf32>
    %85 = vector.shape_cast %84 : vector<16xf32> to vector<16x1xf32>
    %86 = tpu.reciprocal %85 {approx = true} : vector<16x1xf32> -> vector<16x1xf32>
    %87 = arith.mulf %85, %86 : vector<16x1xf32>
    %cst_28 = arith.constant 2.000000e+00 : f32
    %88 = vector.broadcast %cst_28 : f32 to vector<16x1xf32>
    %89 = arith.subf %88, %87 : vector<16x1xf32>
    %90 = arith.mulf %86, %89 : vector<16x1xf32>
    %91 = vector.broadcast %90 : vector<16x1xf32> to vector<16x16xf32>
    %92 = arith.mulf %83, %91 : vector<16x16xf32>
    %93 = vector.broadcast %68 : vector<1x32xf32> to vector<16x32xf32>
    %94 = arith.mulf %8, %93 : vector<16x32xf32>
    %cst_29 = arith.constant dense<0.000000e+00> : vector<16x32xf32>
    %95 = tpu.matmul %92, %94, %cst_29 {dimension_numbers = #tpu.dot_dimension_numbers<[1], [0], [0], [1], [0, 0, 1, 1], [], []>} : vector<16x16xf32>, vector<16x32xf32>, vector<16x32xf32> -> vector<16x32xf32>
    %96 = arith.addf %58, %95 : vector<16x32xf32>
    %c2_i32 = arith.constant 2 : i32
    %c8_i32_30 = arith.constant 8 : i32
    %97 = arith.muli %c2_i32, %c8_i32_30 : i32
    %98 = vector.broadcast %97 : i32 to vector<1x32xi32>
    %99 = arith.cmpi sge, %12, %98 : vector<1x32xi32>
    %c1_i32_31 = arith.constant 1 : i32
    %100 = arith.addi %c2_i32, %c1_i32_31 : i32
    %c8_i32_32 = arith.constant 8 : i32
    %101 = arith.muli %100, %c8_i32_32 : i32
    %102 = vector.broadcast %101 : i32 to vector<1x32xi32>
    %103 = arith.cmpi slt, %12, %102 : vector<1x32xi32>
    %104 = arith.andi %99, %103 : vector<1x32xi1>
    %105 = arith.extui %104 : vector<1x32xi1> to vector<1x32xi32>
    %106 = arith.sitofp %105 : vector<1x32xi32> to vector<1x32xf32>
    %107 = vector.broadcast %106 : vector<1x32xf32> to vector<16x32xf32>
    %108 = arith.mulf %7, %107 : vector<16x32xf32>
    %cst_33 = arith.constant dense<0.000000e+00> : vector<16x16xf32>
    %109 = tpu.matmul %14, %108, %cst_33 {dimension_numbers = #tpu.dot_dimension_numbers<[1], [1], [0], [0], [0, 0, 1, 0], [], []>} : vector<16x32xf32>, vector<16x32xf32>, vector<16x16xf32> -> vector<16x16xf32>
    %110 = vector.broadcast %cst_10 : f32 to vector<16x16xf32>
    %111 = arith.select %19, %109, %110 : vector<16x16xi1>, vector<16x16xf32>
    %cst_34 = arith.constant 0.000000e+00 : f32
    %112 = vector.broadcast %cst_34 : f32 to vector<16x16xf32>
    %113 = arith.cmpf oge, %111, %112 : vector<16x16xf32>
    %cst_35 = arith.constant 2.000000e-01 : f32
    %114 = vector.broadcast %cst_35 : f32 to vector<16x16xf32>
    %115 = arith.mulf %114, %111 : vector<16x16xf32>
    %116 = arith.select %113, %111, %115 : vector<16x16xi1>, vector<16x16xf32>
    %cst_36 = arith.constant dense<0xFF800000> : vector<16xf32>
    %117 = vector.multi_reduction <maximumf>, %116, %cst_36 [1] : vector<16x16xf32> to vector<16xf32>
    %118 = vector.shape_cast %117 : vector<16xf32> to vector<16x1xf32>
    %119 = vector.broadcast %118 : vector<16x1xf32> to vector<16x16xf32>
    %120 = arith.subf %116, %119 : vector<16x16xf32>
    %121 = math.exp %120 : vector<16x16xf32>
    %cst_37 = arith.constant dense<0.000000e+00> : vector<16xf32>
    %122 = vector.multi_reduction <add>, %121, %cst_37 [1] : vector<16x16xf32> to vector<16xf32>
    %123 = vector.shape_cast %122 : vector<16xf32> to vector<16x1xf32>
    %124 = tpu.reciprocal %123 {approx = true} : vector<16x1xf32> -> vector<16x1xf32>
    %125 = arith.mulf %123, %124 : vector<16x1xf32>
    %cst_38 = arith.constant 2.000000e+00 : f32
    %126 = vector.broadcast %cst_38 : f32 to vector<16x1xf32>
    %127 = arith.subf %126, %125 : vector<16x1xf32>
    %128 = arith.mulf %124, %127 : vector<16x1xf32>
    %129 = vector.broadcast %128 : vector<16x1xf32> to vector<16x16xf32>
    %130 = arith.mulf %121, %129 : vector<16x16xf32>
    %131 = vector.broadcast %106 : vector<1x32xf32> to vector<16x32xf32>
    %132 = arith.mulf %8, %131 : vector<16x32xf32>
    %cst_39 = arith.constant dense<0.000000e+00> : vector<16x32xf32>
    %133 = tpu.matmul %130, %132, %cst_39 {dimension_numbers = #tpu.dot_dimension_numbers<[1], [0], [0], [1], [0, 0, 1, 1], [], []>} : vector<16x16xf32>, vector<16x32xf32>, vector<16x32xf32> -> vector<16x32xf32>
    %134 = arith.addf %96, %133 : vector<16x32xf32>
    %c3_i32 = arith.constant 3 : i32
    %c8_i32_40 = arith.constant 8 : i32
    %135 = arith.muli %c3_i32, %c8_i32_40 : i32
    %136 = vector.broadcast %135 : i32 to vector<1x32xi32>
    %137 = arith.cmpi sge, %12, %136 : vector<1x32xi32>
    %c1_i32_41 = arith.constant 1 : i32
    %138 = arith.addi %c3_i32, %c1_i32_41 : i32
    %c8_i32_42 = arith.constant 8 : i32
    %139 = arith.muli %138, %c8_i32_42 : i32
    %140 = vector.broadcast %139 : i32 to vector<1x32xi32>
    %141 = arith.cmpi slt, %12, %140 : vector<1x32xi32>
    %142 = arith.andi %137, %141 : vector<1x32xi1>
    %143 = arith.extui %142 : vector<1x32xi1> to vector<1x32xi32>
    %144 = arith.sitofp %143 : vector<1x32xi32> to vector<1x32xf32>
    %145 = vector.broadcast %144 : vector<1x32xf32> to vector<16x32xf32>
    %146 = arith.mulf %7, %145 : vector<16x32xf32>
    %cst_43 = arith.constant dense<0.000000e+00> : vector<16x16xf32>
    %147 = tpu.matmul %14, %146, %cst_43 {dimension_numbers = #tpu.dot_dimension_numbers<[1], [1], [0], [0], [0, 0, 1, 0], [], []>} : vector<16x32xf32>, vector<16x32xf32>, vector<16x16xf32> -> vector<16x16xf32>
    %148 = vector.broadcast %cst_10 : f32 to vector<16x16xf32>
    %149 = arith.select %19, %147, %148 : vector<16x16xi1>, vector<16x16xf32>
    %cst_44 = arith.constant 0.000000e+00 : f32
    %150 = vector.broadcast %cst_44 : f32 to vector<16x16xf32>
    %151 = arith.cmpf oge, %149, %150 : vector<16x16xf32>
    %cst_45 = arith.constant 2.000000e-01 : f32
    %152 = vector.broadcast %cst_45 : f32 to vector<16x16xf32>
    %153 = arith.mulf %152, %149 : vector<16x16xf32>
    %154 = arith.select %151, %149, %153 : vector<16x16xi1>, vector<16x16xf32>
    %cst_46 = arith.constant dense<0xFF800000> : vector<16xf32>
    %155 = vector.multi_reduction <maximumf>, %154, %cst_46 [1] : vector<16x16xf32> to vector<16xf32>
    %156 = vector.shape_cast %155 : vector<16xf32> to vector<16x1xf32>
    %157 = vector.broadcast %156 : vector<16x1xf32> to vector<16x16xf32>
    %158 = arith.subf %154, %157 : vector<16x16xf32>
    %159 = math.exp %158 : vector<16x16xf32>
    %cst_47 = arith.constant dense<0.000000e+00> : vector<16xf32>
    %160 = vector.multi_reduction <add>, %159, %cst_47 [1] : vector<16x16xf32> to vector<16xf32>
    %161 = vector.shape_cast %160 : vector<16xf32> to vector<16x1xf32>
    %162 = tpu.reciprocal %161 {approx = true} : vector<16x1xf32> -> vector<16x1xf32>
    %163 = arith.mulf %161, %162 : vector<16x1xf32>
    %cst_48 = arith.constant 2.000000e+00 : f32
    %164 = vector.broadcast %cst_48 : f32 to vector<16x1xf32>
    %165 = arith.subf %164, %163 : vector<16x1xf32>
    %166 = arith.mulf %162, %165 : vector<16x1xf32>
    %167 = vector.broadcast %166 : vector<16x1xf32> to vector<16x16xf32>
    %168 = arith.mulf %159, %167 : vector<16x16xf32>
    %169 = vector.broadcast %144 : vector<1x32xf32> to vector<16x32xf32>
    %170 = arith.mulf %8, %169 : vector<16x32xf32>
    %cst_49 = arith.constant dense<0.000000e+00> : vector<16x32xf32>
    %171 = tpu.matmul %168, %170, %cst_49 {dimension_numbers = #tpu.dot_dimension_numbers<[1], [0], [0], [1], [0, 0, 1, 1], [], []>} : vector<16x16xf32>, vector<16x32xf32>, vector<16x32xf32> -> vector<16x32xf32>
    %172 = arith.addf %134, %171 : vector<16x32xf32>
    %c4_i32 = arith.constant 4 : i32
    %c0_50 = arith.constant 0 : index
    %c0_51 = arith.constant 0 : index
    %173 = vector.load %arg5[%c0_50, %c0_51] : memref<32x32xf32, #tpu.memory_space<vmem>>, vector<32x32xf32>
    %cst_52 = arith.constant dense<0.000000e+00> : vector<16x32xf32>
    %174 = tpu.matmul %172, %173, %cst_52 {dimension_numbers = #tpu.dot_dimension_numbers<[1], [0], [0], [1], [0, 0, 1, 1], [], []>} : vector<16x32xf32>, vector<32x32xf32>, vector<16x32xf32> -> vector<16x32xf32>
    %c0_53 = arith.constant 0 : index
    %c0_54 = arith.constant 0 : index
    %175 = vector.load %arg6[%c0_53, %c0_54] : memref<1x32xf32, #tpu.memory_space<vmem>>, vector<1x32xf32>
    %176 = vector.broadcast %175 : vector<1x32xf32> to vector<16x32xf32>
    %177 = arith.addf %174, %176 : vector<16x32xf32>
    %c0_55 = arith.constant 0 : index
    %c0_56 = arith.constant 0 : index
    %178 = vector.load %arg7[%c0_55, %c0_56] : memref<16x32xf32, #tpu.memory_space<vmem>>, vector<16x32xf32>
    tpu.vector_store %arg7[%c0_55, %c0_56], %177 {strides = array<i32>} : memref<16x32xf32, #tpu.memory_space<vmem>>, vector<16x32xf32>,
    return
  }
  func.func @transform_0(%arg0: i32) -> (i32, i32) {
    %c0_i32 = arith.constant 0 : i32
    %c0_i32_0 = arith.constant 0 : i32
    return %arg0, %c0_i32 : i32, i32
  }
  func.func @transform_1(%arg0: i32) -> (i32, i32, i32) {
    %c0_i32 = arith.constant 0 : i32
    %c0_i32_0 = arith.constant 0 : i32
    %c0_i32_1 = arith.constant 0 : i32
    return %arg0, %c0_i32, %c0_i32_0 : i32, i32, i32
  }
  func.func @transform_2(%arg0: i32) -> (i32, i32) {
    %c0_i32 = arith.constant 0 : i32
    %c0_i32_0 = arith.constant 0 : i32
    %c0_i32_1 = arith.constant 0 : i32
    return %c0_i32, %c0_i32_0 : i32, i32
  }
  func.func @transform_3(%arg0: i32) -> (i32, i32) {
    %c0_i32 = arith.constant 0 : i32
    %c0_i32_0 = arith.constant 0 : i32
    %c0_i32_1 = arith.constant 0 : i32
    return %c0_i32, %c0_i32_0 : i32, i32
  }
  func.func @transform_4(%arg0: i32) -> (i32, i32) {
    %c0_i32 = arith.constant 0 : i32
    %c0_i32_0 = arith.constant 0 : i32
    %c0_i32_1 = arith.constant 0 : i32
    return %c0_i32, %c0_i32_0 : i32, i32
  }
  func.func @transform_5(%arg0: i32) -> (i32, i32) {
    %c0_i32 = arith.constant 0 : i32
    %c0_i32_0 = arith.constant 0 : i32
    %c0_i32_1 = arith.constant 0 : i32
    return %c0_i32, %c0_i32_0 : i32, i32
  }
  func.func @transform_6(%arg0: i32) -> (i32, i32) {
    %c0_i32 = arith.constant 0 : i32
    %c0_i32_0 = arith.constant 0 : i32
    return %arg0, %c0_i32 : i32, i32
  }
}

</mosaic_0001>

<llo_original>
// kernel: tpu_custom_call.1
$region0: #{tpu_custom_call.1}
  #allocation0 [shape = 'u32[]', space=smem, size = 0x4, offset = 0x4, fixed_abs, tag = 'smem constant byte address 0x4 - core index']
  #allocation1 [shape = 'u32[144,128]{1,0:T(1,128)}', space=vmem, size = 0x12000, scoped, tag = 'internal scratch']
  %s0 = inlined_call_operand.hbm [shape: f32[32,32], index: 0, kind: input, shape index: {}]
  %s1 = inlined_call_operand.hbm [shape: s8[2,16,16], index: 1, kind: input, shape index: {}]
  %s2 = inlined_call_operand.hbm [shape: f32[32,96], index: 2, kind: input, shape index: {}]
  %s3 = inlined_call_operand.vmem [shape: f32[1,96], index: 3, kind: input, shape index: {}]
  %s4 = inlined_call_operand.hbm [shape: f32[32,32], index: 4, kind: input, shape index: {}]
  %s5 = inlined_call_operand.vmem [shape: f32[1,32], index: 5, kind: input, shape index: {}]
  %s6 = inlined_call_operand.hbm [shape: f32[32,32], index: 6, kind: output, shape index: {}]
  %s7 = sld [smem:[#allocation0]]
  $region73: #{tpu_custom_call.1} parent=0
    _
  %s9 = ssub.s32 1, %s7
  %s10 = scalar_select 0, %s9, %s7
  $region1: #{tpu_custom_call.1} parent=0
    #allocation2 [shape = 'u8[16384]{0}', space=vmem, size = 0x4000, scoped, tag = 'input window, operand 0']
    #allocation3 [shape = 's32[2]{0}', space=sflag, size = 0x8, scoped, tag = 'scoped memory for tpu_custom_call.1']
    #allocation4 [shape = 's32[2]{0}', space=sflag, size = 0x8, scoped, tag = 'scoped memory for tpu_custom_call.1']
    #allocation5 [shape = 'u8[4096]{0}', space=vmem, size = 0x1000, scoped, tag = 'input window, operand 1']
    #allocation6 [shape = 's32[2]{0}', space=sflag, size = 0x8, scoped, tag = 'scoped memory for tpu_custom_call.1']
    #allocation7 [shape = 'u8[16384]{0}', space=vmem, size = 0x4000, scoped, tag = 'input window, operand 2, single buffered']
    #allocation8 [shape = 'u8[16384]{0}', space=vmem, size = 0x4000, scoped, tag = 'input window, operand 4, single buffered']
    #allocation9 [shape = 's32[1]{0}', space=sflag, size = 0x4, scoped, tag = 'scoped memory for tpu_custom_call.1']
    #allocation10 [shape = 'u8[16384]{0}', space=vmem, size = 0x4000, scoped, tag = 'output window, operand 0']
    %11 = vsyncpa [#allocation3], 0
    %s12 = scalar_lea.sflag [#allocation3], 1
    %13 = vsyncpa %s12, 0
    %14 = vsyncpa [#allocation6], 0
    %s15 = scalar_lea.sflag [#allocation6], 1
    %16 = vsyncpa %s15, 0
    %17 = vsyncpa [#allocation9], 0
    %18 = vsyncpa [#allocation4], 0
    %s19 = scalar_lea.sflag [#allocation4], 1
    %20 = vsyncpa %s19, 0
    loop: start=0, step=1, limit=4
    $region2: #{tpu_custom_call.1} parent=1 // loop_pre_header
      _
    $region3: #{tpu_custom_call.1} parent=1 // loop_header
      %s22 = sphi 0, %s26
      %p23 = scmp.ge.s32.totalorder %s22, 4
      %s32 = sphi 0, %s34
      %s35 = sphi 0, %s32
      %s36 = sphi 0, %s35
      %s52 = sphi 0, %s36
      %s58 = sphi 0, %s60
      %s61 = sphi 0, %s58
      %s62 = sphi 0, %s61
      %s78 = sphi 0, %s62
      %s82 = sphi 0, %s82
      %s84 = sphi 0, %s82
      %s85 = sphi 0, %s84
      %s99 = sphi 0, %s85
      %s103 = sphi 0, %s103
      %s105 = sphi 0, %s103
      %s106 = sphi 0, %s105
      %s120 = sphi 0, %s106
      %s124 = sphi 0, %s124
      %s126 = sphi 0, %s124
      %s127 = sphi 0, %s126
      %s141 = sphi 0, %s127
      %s145 = sphi 0, %s145
      %s147 = sphi 0, %s145
      %s148 = sphi 0, %s147
      %s162 = sphi 0, %s148
      %s168 = sphi 0, %s170
      %s171 = sphi 0, %s168
      %s172 = sphi 0, %s171
      %s188 = sphi 0, %s172
    $region4: #{tpu_custom_call.1} parent=1 // loop_header_branch
      %25 = sbr.rel (%p23) target = $region8
    $region5: #{tpu_custom_call.1} parent=1 // loop_body
      %s27 = ssub.s32 %s22, 1
      %s28 = ssub.s32 %s22, 2
      %s29 = sadd.s32 %s22, 1
      %s30 = ssub.s32 %s22, %s29
      %p31 = scmp.eq.s32.totalorder %s30, 0
      %s33 = sadd.s32 %s32, 1
      %s34 = scalar_select %p31, %s32, %s33
      %p37 = pneg %p31
      %p38 = scmp.eq.s32.totalorder %s22, 1
      %p39 = por %p37, %p38
      %p40 = scmp.ne.s32.totalorder %s32, %s35
      %p41 = scmp.eq.s32.totalorder %s22, 0
      %p42 = por %p40, %p41
      %p43 = scmp.ne.s32.totalorder %s32, %s35
      %p44 = scmp.eq.s32.totalorder %s27, 1
      %p45 = por %p43, %p44
      %p46 = scmp.ne.s32.totalorder %s35, %s36
      %p47 = scmp.eq.s32.totalorder %s27, 0
      %p48 = por %p46, %p47
      %p49 = scmp.ne.s32.totalorder %s35, %s36
      %p50 = scmp.eq.s32.totalorder %s28, 1
      %p51 = por %p49, %p50
      %p53 = scmp.ne.s32.totalorder %s36, %s52
      %p54 = scmp.eq.s32.totalorder %s28, 0
      %p55 = por %p53, %p54
      %s56 = ssub.s32 %s22, %s29
      %p57 = scmp.eq.s32.totalorder %s56, 0
      %s59 = sadd.s32 %s58, 1
      %s60 = scalar_select %p57, %s58, %s59
      %p63 = pneg %p57
      %p64 = scmp.eq.s32.totalorder %s22, 1
      %p65 = por %p63, %p64
      %p66 = scmp.ne.s32.totalorder %s58, %s61
      %p67 = scmp.eq.s32.totalorder %s22, 0
      %p68 = por %p66, %p67
      %p69 = scmp.ne.s32.totalorder %s58, %s61
      %p70 = scmp.eq.s32.totalorder %s27, 1
      %p71 = por %p69, %p70
      %p72 = scmp.ne.s32.totalorder %s61, %s62
      %p73 = scmp.eq.s32.totalorder %s27, 0
      %p74 = por %p72, %p73
      %p75 = scmp.ne.s32.totalorder %s61, %s62
      %p76 = scmp.eq.s32.totalorder %s28, 1
      %p77 = por %p75, %p76
      %p79 = scmp.ne.s32.totalorder %s62, %s78
      %p80 = scmp.eq.s32.totalorder %s28, 0
      %p81 = por %p79, %p80
      %s83 = sadd.s32 %s82, 1
      %p86 = scmp.eq.s32.totalorder %s22, 1
      %p87 = scmp.ne.s32.totalorder %s82, %s84
      %p88 = scmp.eq.s32.totalorder %s22, 0
      %p89 = por %p87, %p88
      %p90 = scmp.ne.s32.totalorder %s82, %s84
      %p91 = scmp.eq.s32.totalorder %s27, 1
      %p92 = por %p90, %p91
      %p93 = scmp.ne.s32.totalorder %s84, %s85
      %p94 = scmp.eq.s32.totalorder %s27, 0
      %p95 = por %p93, %p94
      %p96 = scmp.ne.s32.totalorder %s84, %s85
      %p97 = scmp.eq.s32.totalorder %s28, 1
      %p98 = por %p96, %p97
      %p100 = scmp.ne.s32.totalorder %s85, %s99
      %p101 = scmp.eq.s32.totalorder %s28, 0
      %p102 = por %p100, %p101
      %s104 = sadd.s32 %s103, 1
      %p107 = scmp.eq.s32.totalorder %s22, 1
      %p108 = scmp.ne.s32.totalorder %s103, %s105
      %p109 = scmp.eq.s32.totalorder %s22, 0
      %p110 = por %p108, %p109
      %p111 = scmp.ne.s32.totalorder %s103, %s105
      %p112 = scmp.eq.s32.totalorder %s27, 1
      %p113 = por %p111, %p112
      %p114 = scmp.ne.s32.totalorder %s105, %s106
      %p115 = scmp.eq.s32.totalorder %s27, 0
      %p116 = por %p114, %p115
      %p117 = scmp.ne.s32.totalorder %s105, %s106
      %p118 = scmp.eq.s32.totalorder %s28, 1
      %p119 = por %p117, %p118
      %p121 = scmp.ne.s32.totalorder %s106, %s120
      %p122 = scmp.eq.s32.totalorder %s28, 0
      %p123 = por %p121, %p122
      %s125 = sadd.s32 %s124, 1
      %p128 = scmp.eq.s32.totalorder %s22, 1
      %p129 = scmp.ne.s32.totalorder %s124, %s126
      %p130 = scmp.eq.s32.totalorder %s22, 0
      %p131 = por %p129, %p130
      %p132 = scmp.ne.s32.totalorder %s124, %s126
      %p133 = scmp.eq.s32.totalorder %s27, 1
      %p134 = por %p132, %p133
      %p135 = scmp.ne.s32.totalorder %s126, %s127
      %p136 = scmp.eq.s32.totalorder %s27, 0
      %p137 = por %p135, %p136
      %p138 = scmp.ne.s32.totalorder %s126, %s127
      %p139 = scmp.eq.s32.totalorder %s28, 1
      %p140 = por %p138, %p139
      %p142 = scmp.ne.s32.totalorder %s127, %s141
      %p143 = scmp.eq.s32.totalorder %s28, 0
      %p144 = por %p142, %p143
      %s146 = sadd.s32 %s145, 1
      %p149 = scmp.eq.s32.totalorder %s22, 1
      %p150 = scmp.ne.s32.totalorder %s145, %s147
      %p151 = scmp.eq.s32.totalorder %s22, 0
      %p152 = por %p150, %p151
      %p153 = scmp.ne.s32.totalorder %s145, %s147
      %p154 = scmp.eq.s32.totalorder %s27, 1
      %p155 = por %p153, %p154
      %p156 = scmp.ne.s32.totalorder %s147, %s148
      %p157 = scmp.eq.s32.totalorder %s27, 0
      %p158 = por %p156, %p157
      %p159 = scmp.ne.s32.totalorder %s147, %s148
      %p160 = scmp.eq.s32.totalorder %s28, 1
      %p161 = por %p159, %p160
      %p163 = scmp.ne.s32.totalorder %s148, %s162
      %p164 = scmp.eq.s32.totalorder %s28, 0
      %p165 = por %p163, %p164
      %s166 = ssub.s32 %s22, %s29
      %p167 = scmp.eq.s32.totalorder %s166, 0
      %s169 = sadd.s32 %s168, 1
      %s170 = scalar_select %p167, %s168, %s169
      %p173 = pneg %p167
      %p174 = scmp.eq.s32.totalorder %s22, 1
      %p175 = por %p173, %p174
      %p176 = scmp.ne.s32.totalorder %s168, %s171
      %p177 = scmp.eq.s32.totalorder %s22, 0
      %p178 = por %p176, %p177
      %p179 = scmp.ne.s32.totalorder %s168, %s171
      %p180 = scmp.eq.s32.totalorder %s27, 1
      %p181 = por %p179, %p180
      %p182 = scmp.ne.s32.totalorder %s171, %s172
      %p183 = scmp.eq.s32.totalorder %s27, 0
      %p184 = por %p182, %p183
      %p185 = scmp.ne.s32.totalorder %s171, %s172
      %p186 = scmp.eq.s32.totalorder %s28, 1
      %p187 = por %p185, %p186
      %p189 = scmp.ne.s32.totalorder %s172, %s188
      %p190 = scmp.eq.s32.totalorder %s28, 0
      %p191 = por %p189, %p190
      %p192 = scmp.le.s32.totalorder 1, %s22
      %p193 = scmp.lt.s32.totalorder %s22, 3
      %p194 = pnand %p192, %p193
      %p195 = pneg %p194
      // Predicated region
      $region9: #{tpu_custom_call.1} parent=5 // pred_check
        _
      $region10: #{tpu_custom_call.1} parent=5 // pred_check_branch
        %197 = sbr.rel (%p194) target = $region12
      $region11: #{tpu_custom_call.1} parent=5 // pred_region
        %s198 = ssub.s32 %s22, 1
        // Predicated region
        $region13: #{tpu_custom_call.1} parent=11 // pred_check
          %p199 = pneg %p95
        $region14: #{tpu_custom_call.1} parent=11 // pred_check_branch
          %201 = sbr.rel (%p199) target = $region16
        $region15: #{tpu_custom_call.1} parent=11 // pred_region
          %s203 = ssub.s32 512, 512
          %204 = vsyncadd [#allocation6], %s203
          %s205 = sshll.u32 [#allocation7], 4
          %s206 = int_to_ptr.vmem [resolvable:$true] %s205
          %211 = dma.hbm_to_vmem [thread:$0]  %s2, 512, %s206, [#allocation6], 128, 128, 8
        $region16: #{tpu_custom_call.1} parent=11 // pred_fallthru
          _
        // Predicated region
        $region17: #{tpu_custom_call.1} parent=11 // pred_check
          %p212 = pneg %p116
        $region18: #{tpu_custom_call.1} parent=11 // pred_check_branch
          %214 = sbr.rel (%p212) target = $region20
        $region19: #{tpu_custom_call.1} parent=11 // pred_region
          _
        $region20: #{tpu_custom_call.1} parent=11 // pred_fallthru
          _
        // Predicated region
        $region21: #{tpu_custom_call.1} parent=11 // pred_check
          %p215 = pneg %p137
        $region22: #{tpu_custom_call.1} parent=11 // pred_check_branch
          %217 = sbr.rel (%p215) target = $region24
        $region23: #{tpu_custom_call.1} parent=11 // pred_region
          %s219 = ssub.s32 512, 512
          %220 = vsyncadd [#allocation9], %s219
          %s221 = sshll.u32 [#allocation8], 4
          %s222 = int_to_ptr.vmem [resolvable:$true] %s221
          %227 = dma.hbm_to_vmem [thread:$0]  %s4, 512, %s222, [#allocation9], 128, 128, 8
        $region24: #{tpu_custom_call.1} parent=11 // pred_fallthru
          _
        // Predicated region
        $region25: #{tpu_custom_call.1} parent=11 // pred_check
          %p228 = pneg %p158
        $region26: #{tpu_custom_call.1} parent=11 // pred_check_branch
          %230 = sbr.rel (%p228) target = $region28
        $region27: #{tpu_custom_call.1} parent=11 // pred_region
          _
        $region28: #{tpu_custom_call.1} parent=11 // pred_fallthru
          _
      $region12: #{tpu_custom_call.1} parent=5 // pred_fallthru
        _
      %p231 = scmp.lt.s32.totalorder %s22, 2
      // Predicated region
      $region29: #{tpu_custom_call.1} parent=5 // pred_check
        %p232 = pneg %p231
      $region30: #{tpu_custom_call.1} parent=5 // pred_check_branch
        %234 = sbr.rel (%p232) target = $region32
      $region31: #{tpu_custom_call.1} parent=5 // pred_region
        // Predicated region
        $region33: #{tpu_custom_call.1} parent=31 // pred_check
          %p235 = pneg %p42
        $region34: #{tpu_custom_call.1} parent=31 // pred_check_branch
          %237 = sbr.rel (%p235) target = $region36
        $region35: #{tpu_custom_call.1} parent=31 // pred_region
          %s238 = sand.u32 %s32, 1
          %s239 = scalar_lea.sflag [#allocation3], %s238
          %s240 = sand.u32 %s32, 1
          %s241 = smul.addr %s240, 16
          %s242 = scalar_lea.vmem [#allocation2], %s241
          %s243 = smul.u32 2, %s22
          %s245 = ssub.s32 256, 256
          %246 = vsyncadd %s239, %s245
          %s247 = smul.addr %s243, 128
          %s248 = scalar_lea.hbm %s0, %s247
          %s249 = sshll.u32 %s242, 4
          %s250 = int_to_ptr.vmem [resolvable:$true] %s249
          %255 = dma.hbm_to_vmem [thread:$0]  %s248, 256, %s250, %s239, 128, 128, 8
        $region36: #{tpu_custom_call.1} parent=31 // pred_fallthru
          _
        // Predicated region
        $region37: #{tpu_custom_call.1} parent=31 // pred_check
          %p256 = pneg %p68
        $region38: #{tpu_custom_call.1} parent=31 // pred_check_branch
          %258 = sbr.rel (%p256) target = $region40
        $region39: #{tpu_custom_call.1} parent=31 // pred_region
          %s259 = sand.u32 %s22, 1
          %s260 = scalar_lea.sflag [#allocation6], %s259
          %s261 = sand.u32 %s58, 1
          %s262 = smul.addr %s261, 4
          %s263 = scalar_lea.vmem [#allocation5], %s262
          %s265 = ssub.s32 64, 64
          %266 = vsyncadd %s260, %s265
          %s267 = smul.addr %s22, 2
          %s268 = smul.addr %s267, 32
          %s269 = scalar_lea.hbm %s1, %s268
          %s270 = sshll.u32 %s263, 4
          %s271 = int_to_ptr.vmem [resolvable:$true] %s270
          %276 = dma.hbm_to_vmem [thread:$0]  %s269, 64, %s271, %s260, 32, 32, 2
        $region40: #{tpu_custom_call.1} parent=31 // pred_fallthru
          _
      $region32: #{tpu_custom_call.1} parent=5 // pred_fallthru
        _
      %p277 = scmp.le.s32.totalorder 1, %s22
      %p278 = scmp.lt.s32.totalorder %s22, 3
      %p279 = pnand %p277, %p278
      %p280 = pneg %p279
      // Predicated region
      $region41: #{tpu_custom_call.1} parent=5 // pred_check
        _
      $region42: #{tpu_custom_call.1} parent=5 // pred_check_branch
        %282 = sbr.rel (%p279) target = $region44
      $region43: #{tpu_custom_call.1} parent=5 // pred_region
        %s283 = ssub.s32 %s22, 1
        %s284 = sand.u32 %s35, 1
        %s285 = scalar_lea.sflag [#allocation3], %s284
        %s286 = sand.u32 %s35, 1
        %s287 = smul.addr %s286, 16
        %s288 = scalar_lea.vmem [#allocation2], %s287
        // Predicated region
        $region45: #{tpu_custom_call.1} parent=43 // pred_check
          %p289 = pneg %p48
        $region46: #{tpu_custom_call.1} parent=43 // pred_check_branch
          %291 = sbr.rel (%p289) target = $region48
        $region47: #{tpu_custom_call.1} parent=43 // pred_region
          %292 = dma.done %s285, 256
        $region48: #{tpu_custom_call.1} parent=43 // pred_fallthru
          _
        %s293 = sand.u32 %s27, 1
        %s294 = scalar_lea.sflag [#allocation6], %s293
        %s295 = sand.u32 %s61, 1
        %s296 = smul.addr %s295, 4
        %s297 = scalar_lea.vmem [#allocation5], %s296
        // Predicated region
        $region49: #{tpu_custom_call.1} parent=43 // pred_check
          %p298 = pneg %p74
        $region50: #{tpu_custom_call.1} parent=43 // pred_check_branch
          %300 = sbr.rel (%p298) target = $region52
        $region51: #{tpu_custom_call.1} parent=43 // pred_region
          %301 = dma.done %s294, 64
        $region52: #{tpu_custom_call.1} parent=43 // pred_fallthru
          _
        // Predicated region
        $region53: #{tpu_custom_call.1} parent=43 // pred_check
          %p302 = pneg %p95
        $region54: #{tpu_custom_call.1} parent=43 // pred_check_branch
          %304 = sbr.rel (%p302) target = $region56
        $region55: #{tpu_custom_call.1} parent=43 // pred_region
          %305 = dma.done [#allocation6], 512
        $region56: #{tpu_custom_call.1} parent=43 // pred_fallthru
          _
        // Predicated region
        $region57: #{tpu_custom_call.1} parent=43 // pred_check
          %p306 = pneg %p137
        $region58: #{tpu_custom_call.1} parent=43 // pred_check_branch
          %308 = sbr.rel (%p306) target = $region60
        $region59: #{tpu_custom_call.1} parent=43 // pred_region
          %309 = dma.done [#allocation9], 512
        $region60: #{tpu_custom_call.1} parent=43 // pred_fallthru
          _
        %s310 = sand.u32 %s35, 1
        %s311 = scalar_lea.sflag [#allocation3], %s310
        %s312 = sand.u32 %s35, 1
        %s313 = smul.addr %s312, 16
        %s314 = scalar_lea.vmem [#allocation2], %s313
        %p315 = pneg %p48
        %p316 = pneg %p45
        %s317 = sand.u32 %s27, 1
        %s318 = scalar_lea.sflag [#allocation6], %s317
        %s319 = sand.u32 %s61, 1
        %s320 = smul.addr %s319, 4
        %s321 = scalar_lea.vmem [#allocation5], %s320
        %p322 = pneg %p74
        %p323 = pneg %p71
        %p324 = pneg %p95
        %p325 = pneg %p92
        %p326 = pneg %p116
        %p327 = pneg %p113
        %p328 = pneg %p137
        %p329 = pneg %p134
        %p330 = pneg %p158
        %p331 = pneg %p155
        %p332 = pneg %p184
        %p333 = pneg %p181
        %s334 = sand.u32 %s171, 1
        %s335 = scalar_lea.sflag [#allocation4], %s334
        %s336 = sand.u32 %s171, 1
        %s337 = smul.addr %s336, 16
        %s338 = scalar_lea.vmem [#allocation10], %s337
        %s339 = smul.u32 2, %s27
        %s340 = smul.u32 2, %s27
        %v343 = vld [vmem:[%s288] sm:$0xff]
        %v344 = vld [vmem:[%s288 + $0x8] sm:$0xff]
        %v345 = vld [vmem:[#allocation7] sm:$0xff]
        %v346 = vld [vmem:[#allocation7 + $0x8] sm:$0xff]
        %v347 = vld [vmem:[#allocation7 + $0x10] sm:$0xff]
        %v348 = vld [vmem:[#allocation7 + $0x18] sm:$0xff]
        %v349 = vld [vmem:[%s3] sm:$0x1]
        %v351 = vlaneseq
        %v352 = vshrl.u32 %v351, 7
        %v353 = vsub.s32 0, %v352
        %v354 = vrot.slane %v349, %v353
        %vm356 = vcmask 261120
        %v358 = vsel %vm356, %v343, 0
        %v361 = vsel %vm356, %v344, 0
        %363 = vmatprep.subr.mxu0 0.0
        %364 = vmatpush1.msra.mxu0 0.0
        %365 = vmatprep.subr.mxu0 0.0
        %366 = vmatpush1.msra.mxu0 0.0
        %367 = vmatprep.subr.mxu0 0.0
        %368 = vmatpush1.msra.mxu0 0.0
        %369 = vmatprep.subr.mxu0 0.0
        %370 = vmatpush1.msra.mxu0 0.0
        %371 = vmatprep.subr.mxu0 0.0
        %372 = vmatpush1.msra.mxu0 0.0
        %373 = vmatprep.subr.mxu0 0.0
        %374 = vmatpush1.msra.mxu0 0.0
        %375 = vmatprep.subr.mxu0 0.0
        %376 = vmatpush1.msra.mxu0 0.0
        %377 = vmatprep.subr.mxu0 0.0
        %378 = vmatpush1.msra.mxu0 0.0
        %379 = vmatprep.subr.mxu0 0.0
        %380 = vmatpush1.msra.mxu0 0.0
        %381 = vmatprep.subr.mxu0 0.0
        %382 = vmatpush1.msra.mxu0 0.0
        %383 = vmatprep.subr.mxu0 0.0
        %384 = vmatpush1.msra.mxu0 0.0
        %385 = vmatprep.subr.mxu0 0.0
        %386 = vmatpush1.msra.mxu0 0.0
        %387 = vmatprep.subr.mxu0 0.0
        %388 = vmatpush1.msra.mxu0 %v348
        %389 = vmatprep.subr.mxu0 0.0
        %390 = vmatpush1.msra.mxu0 %v347
        %391 = vmatprep.subr.mxu0 0.0
        %392 = vmatpush1.msra.mxu0 %v346
        %393 = vmatprep.subr.mxu0 0.0
        %394 = vmatpush1.msra.mxu0 %v345
        %395 = vmatprep.subr.mxu0 0.0
        %396 = vmatpush2.msra.mxu0 0.0
        %397 = vmatprep.subr.mxu0 0.0
        %398 = vmatpush2.msra.mxu0 0.0
        %399 = vmatprep.subr.mxu0 0.0
        %400 = vmatpush2.msra.mxu0 0.0
        %401 = vmatprep.subr.mxu0 0.0
        %402 = vmatpush2.msra.mxu0 0.0
        %403 = vmatprep.subr.mxu0 0.0
        %404 = vmatpush2.msra.mxu0 0.0
        %405 = vmatprep.subr.mxu0 0.0
        %406 = vmatpush2.msra.mxu0 0.0
        %407 = vmatprep.subr.mxu0 0.0
        %408 = vmatpush2.msra.mxu0 0.0
        %409 = vmatprep.subr.mxu0 0.0
        %410 = vmatpush2.msra.mxu0 0.0
        %411 = vmatprep.subr.mxu0 0.0
        %412 = vmatpush2.msra.mxu0 0.0
        %413 = vmatprep.subr.mxu0 0.0
        %414 = vmatpush2.msra.mxu0 0.0
        %415 = vmatprep.subr.mxu0 0.0
        %416 = vmatpush2.msra.mxu0 0.0
        %417 = vmatprep.subr.mxu0 0.0
        %418 = vmatpush2.msra.mxu0 0.0
        %419 = vmatprep.subr.mxu0 0.0
        %420 = vmatpush2.msra.mxu0 0.0
        %421 = vmatprep.subr.mxu0 0.0
        %422 = vmatpush2.msra.mxu0 0.0
        %423 = vmatprep.subr.mxu0 0.0
        %424 = vmatpush2.msra.mxu0 0.0
        %425 = vmatprep.subr.mxu0 0.0
        %426 = vmatpush2.msra.mxu0 0.0
        %427 = vmatprep.mubr.f32.mxu0 0.0
        %428 = vmatmul.mubr.f32.gmra.mxu0 %v358
        %v429 = vpop.f32.mrf.mxu0
        %v430 = vadd.f32 %v354, %v429
        %v431 = vpop.f32.mrf.mxu0
        %432 = vmatprep.mubr.f32.mxu0 0.0
        %433 = vmatmul.mubr.f32.gmra.mxu0 %v361
        %v434 = vpop.f32.mrf.mxu0
        %v435 = vadd.f32 %v354, %v434
        %v436 = vpop.f32.mrf.mxu0
        %437 = vdwg.mxu0
        %v438 = vlaneseq
        %v439 = vshrl.u32 %v438, 7
        %v440 = vadd.s32 %v439, 8
        %v441 = vlaneseq
        %v442 = vand.u32 %v441, 127
        %vm443 = vcmp.eq.s32.totalorder %v439, %v442
        %vm444 = vcmp.eq.s32.totalorder %v440, %v442
        %v445 = vmul.f32 %v430, 0.35355338
        %v446 = vmul.f32 %v435, 0.35355338
        %v447 = vld [vmem:[%s297] sm:$0x3]
        %v448 = vld [vmem:[%s297 + $0x2] sm:$0x3]
        %vm449 = vnez %v447
        %vm450 = vnez %v448
        %vm451 = vmpackc.low %vm443, %vm443
        %vm452 = vmpackc.even %vm451, %vm451
        %vm453 = vmpackc.low %vm444, %vm444
        %vm454 = vmpackc.even %vm453, %vm453
        %vm455 = vmor %vm449, %vm452
        %vm456 = vmor %vm450, %vm454
        %vm457 = vcmp.ge.s32.totalorder %v442, 0
        %vm458 = vcmp.lt.s32.totalorder %v442, 8
        %vm459 = vmand %vm457, %vm458
        %v460 = vsel %vm459, 1, 0
        %v461 = vcvt.s32.f32 %v460
        %463 = vrot.lane.b32.xlu0 %v461, 32
        %v464 = vpop.permute.xlu0 %463
        %v466 = vmul.f32 %v430, %v464
        %v467 = vmul.f32 %v435, %v464
        %470 = vrot.lane.b32.xlu0 %v466, 96
        %v471 = vpop.permute.xlu0 %470
        %472 = vrot.lane.b32.xlu0 %v467, 96
        %v473 = vpop.permute.xlu0 %472
        %v475 = vsel %vm356, %v445, 0
        %v478 = vsel %vm356, %v446, 0
        %v480 = vsel %vm356, %v471, 0
        %v482 = vsel %vm356, %v473, 0
        %484 = vmatprep.subr.mxu0 0.0
        %485 = vmatpush1.xpose.msra.mxu0 0.0
        %486 = vmatprep.subr.mxu0 0.0
        %487 = vmatpush1.xpose.msra.mxu0 0.0
        %488 = vmatprep.subr.mxu0 0.0
        %489 = vmatpush1.xpose.msra.mxu0 0.0
        %490 = vmatprep.subr.mxu0 0.0
        %491 = vmatpush1.xpose.msra.mxu0 0.0
        %492 = vmatprep.subr.mxu0 0.0
        %493 = vmatpush1.xpose.msra.mxu0 0.0
        %494 = vmatprep.subr.mxu0 0.0
        %495 = vmatpush1.xpose.msra.mxu0 0.0
        %496 = vmatprep.subr.mxu0 0.0
        %497 = vmatpush1.xpose.msra.mxu0 0.0
        %498 = vmatprep.subr.mxu0 0.0
        %499 = vmatpush1.xpose.msra.mxu0 0.0
        %500 = vmatprep.subr.mxu0 0.0
        %501 = vmatpush1.xpose.msra.mxu0 0.0
        %502 = vmatprep.subr.mxu0 0.0
        %503 = vmatpush1.xpose.msra.mxu0 0.0
        %504 = vmatprep.subr.mxu0 0.0
        %505 = vmatpush1.xpose.msra.mxu0 0.0
        %506 = vmatprep.subr.mxu0 0.0
        %507 = vmatpush1.xpose.msra.mxu0 0.0
        %508 = vmatprep.subr.mxu0 0.0
        %509 = vmatpush1.xpose.msra.mxu0 0.0
        %510 = vmatprep.subr.mxu0 0.0
        %511 = vmatpush1.xpose.msra.mxu0 0.0
        %512 = vmatprep.subr.mxu0 0.0
        %513 = vmatpush1.xpose.msra.mxu0 %v482
        %514 = vmatprep.subr.mxu0 0.0
        %515 = vmatpush1.xpose.msra.mxu0 %v480
        %516 = vmatprep.subr.mxu0 0.0
        %517 = vmatpush2.xpose.msra.mxu0 0.0
        %518 = vmatprep.subr.mxu0 0.0
        %519 = vmatpush2.xpose.msra.mxu0 0.0
        %520 = vmatprep.subr.mxu0 0.0
        %521 = vmatpush2.xpose.msra.mxu0 0.0
        %522 = vmatprep.subr.mxu0 0.0
        %523 = vmatpush2.xpose.msra.mxu0 0.0
        %524 = vmatprep.subr.mxu0 0.0
        %525 = vmatpush2.xpose.msra.mxu0 0.0
        %526 = vmatprep.subr.mxu0 0.0
        %527 = vmatpush2.xpose.msra.mxu0 0.0
        %528 = vmatprep.subr.mxu0 0.0
        %529 = vmatpush2.xpose.msra.mxu0 0.0
        %530 = vmatprep.subr.mxu0 0.0
        %531 = vmatpush2.xpose.msra.mxu0 0.0
        %532 = vmatprep.subr.mxu0 0.0
        %533 = vmatpush2.xpose.msra.mxu0 0.0
        %534 = vmatprep.subr.mxu0 0.0
        %535 = vmatpush2.xpose.msra.mxu0 0.0
        %536 = vmatprep.subr.mxu0 0.0
        %537 = vmatpush2.xpose.msra.mxu0 0.0
        %538 = vmatprep.subr.mxu0 0.0
        %539 = vmatpush2.xpose.msra.mxu0 0.0
        %540 = vmatprep.subr.mxu0 0.0
        %541 = vmatpush2.xpose.msra.mxu0 0.0
        %542 = vmatprep.subr.mxu0 0.0
        %543 = vmatpush2.xpose.msra.mxu0 0.0
        %544 = vmatprep.subr.mxu0 0.0
        %545 = vmatpush2.xpose.msra.mxu0 0.0
        %546 = vmatprep.subr.mxu0 0.0
        %547 = vmatpush2.xpose.msra.mxu0 0.0
        %548 = vmatprep.mubr.f32.mxu0 0.0
        %549 = vmatmul.mubr.f32.gmra.mxu0 %v475
        %v550 = vpop.f32.mrf.mxu0
        %v551 = vadd.f32 0.0, %v550
        %v552 = vpop.f32.mrf.mxu0
        %553 = vmatprep.mubr.f32.mxu0 0.0
        %554 = vmatmul.mubr.f32.gmra.mxu0 %v478
        %v555 = vpop.f32.mrf.mxu0
        %v556 = vadd.f32 0.0, %v555
        %v557 = vpop.f32.mrf.mxu0
        %558 = vdwg.mxu0
        %v559 = vsel %vm455, 16843009, 0
        %v560 = vsel %vm456, 16843009, 0
        %v561 = vunpack.c.0.s8 %v559
        %v562 = vunpack.c.0.s8 %v560
        %vm563 = vcmp.ne.s32.totalorder %v561, 0
        %vm564 = vcmp.ne.s32.totalorder %v562, 0
        %v565 = vsel %vm563, %v551, -1e+30
        %v566 = vsel %vm564, %v556, -1e+30
        %vm567 = vcmp.ge.f32.partialorder %v565, 0.0
        %vm568 = vcmp.ge.f32.partialorder %v566, 0.0
        %v569 = vmul.f32 %v565, 0.2
        %v570 = vmul.f32 %v566, 0.2
        %v571 = vsel %vm567, %v565, %v569
        %v572 = vsel %vm568, %v566, %v570
        %vm573 = vcmask 130048
        %v574 = vsel %vm573, %v571, -inf
        %575 = vmax.xlane.f32.xlu0 %v574
        %v576 = vpop.xlane.xlu0 %575
        %v577 = vsel %vm573, %v572, -inf
        %578 = vmax.xlane.f32.xlu0 %v577
        %v579 = vpop.xlane.xlu0 %578
        %v580 = vsub.f32 %v571, %v576
        %v581 = vsub.f32 %v572, %v579
        %v582 = vmul.f32 %v580, 1.442695
        %v583 = vpow.pop %v582
        %v584 = vmul.f32 %v581, 1.442695
        %v585 = vpow.pop %v584
        %v586 = vsel %vm573, %v583, 0.0
        %587 = vadd.xlane.f32.xlu0 %v586
        %v588 = vpop.xlane.xlu0 %587
        %v589 = vsel %vm573, %v585, 0.0
        %590 = vadd.xlane.f32.xlu0 %v589
        %v591 = vpop.xlane.xlu0 %590
        %v592 = vrcp.pop %v588
        %v593 = vrcp.pop %v591
        %v594 = vmul.f32 %v588, %v592
        %v595 = vmul.f32 %v591, %v593
        %v596 = vsub.f32 2.0, %v594
        %v597 = vsub.f32 2.0, %v595
        %v598 = vmul.f32 %v592, %v596
        %v599 = vmul.f32 %v593, %v597
        %v600 = vmul.f32 %v583, %v598
        %v601 = vmul.f32 %v585, %v599
        %602 = vrot.lane.b32.xlu0 %v461, 64
        %v603 = vpop.permute.xlu0 %602
        %v605 = vmul.f32 %v430, %v603
        %v606 = vmul.f32 %v435, %v603
        %vm607 = vcmp.ge.s32.totalorder %v442, 8
        %vm608 = vcmp.lt.s32.totalorder %v442, 16
        %vm609 = vmand %vm607, %vm608
        %v610 = vsel %vm609, 1, 0
        %v611 = vcvt.s32.f32 %v610
        %613 = vrot.lane.b32.xlu0 %v611, 32
        %v614 = vpop.permute.xlu0 %613
        %v616 = vmul.f32 %v430, %v614
        %v617 = vmul.f32 %v435, %v614
        %620 = vrot.lane.b32.xlu0 %v616, 96
        %v621 = vpop.permute.xlu0 %620
        %622 = vrot.lane.b32.xlu0 %v617, 96
        %v623 = vpop.permute.xlu0 %622
        %v624 = vsel %vm356, %v621, 0
        %v626 = vsel %vm356, %v623, 0
        %628 = vmatprep.subr.mxu0 0.0
        %629 = vmatpush1.xpose.msra.mxu0 0.0
        %630 = vmatprep.subr.mxu0 0.0
        %631 = vmatpush1.xpose.msra.mxu0 0.0
        %632 = vmatprep.subr.mxu0 0.0
        %633 = vmatpush1.xpose.msra.mxu0 0.0
        %634 = vmatprep.subr.mxu0 0.0
        %635 = vmatpush1.xpose.msra.mxu0 0.0
        %636 = vmatprep.subr.mxu0 0.0
        %637 = vmatpush1.xpose.msra.mxu0 0.0
        %638 = vmatprep.subr.mxu0 0.0
        %639 = vmatpush1.xpose.msra.mxu0 0.0
        %640 = vmatprep.subr.mxu0 0.0
        %641 = vmatpush1.xpose.msra.mxu0 0.0
        %642 = vmatprep.subr.mxu0 0.0
        %643 = vmatpush1.xpose.msra.mxu0 0.0
        %644 = vmatprep.subr.mxu0 0.0
        %645 = vmatpush1.xpose.msra.mxu0 0.0
        %646 = vmatprep.subr.mxu0 0.0
        %647 = vmatpush1.xpose.msra.mxu0 0.0
        %648 = vmatprep.subr.mxu0 0.0
        %649 = vmatpush1.xpose.msra.mxu0 0.0
        %650 = vmatprep.subr.mxu0 0.0
        %651 = vmatpush1.xpose.msra.mxu0 0.0
        %652 = vmatprep.subr.mxu0 0.0
        %653 = vmatpush1.xpose.msra.mxu0 0.0
        %654 = vmatprep.subr.mxu0 0.0
        %655 = vmatpush1.xpose.msra.mxu0 0.0
        %656 = vmatprep.subr.mxu0 0.0
        %657 = vmatpush1.xpose.msra.mxu0 %v626
        %658 = vmatprep.subr.mxu0 0.0
        %659 = vmatpush1.xpose.msra.mxu0 %v624
        %660 = vmatprep.subr.mxu0 0.0
        %661 = vmatpush2.xpose.msra.mxu0 0.0
        %662 = vmatprep.subr.mxu0 0.0
        %663 = vmatpush2.xpose.msra.mxu0 0.0
        %664 = vmatprep.subr.mxu0 0.0
        %665 = vmatpush2.xpose.msra.mxu0 0.0
        %666 = vmatprep.subr.mxu0 0.0
        %667 = vmatpush2.xpose.msra.mxu0 0.0
        %668 = vmatprep.subr.mxu0 0.0
        %669 = vmatpush2.xpose.msra.mxu0 0.0
        %670 = vmatprep.subr.mxu0 0.0
        %671 = vmatpush2.xpose.msra.mxu0 0.0
        %672 = vmatprep.subr.mxu0 0.0
        %673 = vmatpush2.xpose.msra.mxu0 0.0
        %674 = vmatprep.subr.mxu0 0.0
        %675 = vmatpush2.xpose.msra.mxu0 0.0
        %676 = vmatprep.subr.mxu0 0.0
        %677 = vmatpush2.xpose.msra.mxu0 0.0
        %678 = vmatprep.subr.mxu0 0.0
        %679 = vmatpush2.xpose.msra.mxu0 0.0
        %680 = vmatprep.subr.mxu0 0.0
        %681 = vmatpush2.xpose.msra.mxu0 0.0
        %682 = vmatprep.subr.mxu0 0.0
        %683 = vmatpush2.xpose.msra.mxu0 0.0
        %684 = vmatprep.subr.mxu0 0.0
        %685 = vmatpush2.xpose.msra.mxu0 0.0
        %686 = vmatprep.subr.mxu0 0.0
        %687 = vmatpush2.xpose.msra.mxu0 0.0
        %688 = vmatprep.subr.mxu0 0.0
        %689 = vmatpush2.xpose.msra.mxu0 0.0
        %690 = vmatprep.subr.mxu0 0.0
        %691 = vmatpush2.xpose.msra.mxu0 0.0
        %692 = vmatprep.mubr.f32.mxu0 0.0
        %693 = vmatmul.mubr.f32.gmra.mxu0 %v475
        %v694 = vpop.f32.mrf.mxu0
        %v695 = vadd.f32 0.0, %v694
        %v696 = vpop.f32.mrf.mxu0
        %697 = vmatprep.mubr.f32.mxu0 0.0
        %698 = vmatmul.mubr.f32.gmra.mxu0 %v478
        %v699 = vpop.f32.mrf.mxu0
        %v700 = vadd.f32 0.0, %v699
        %v701 = vpop.f32.mrf.mxu0
        %702 = vdwg.mxu0
        %v703 = vsel %vm563, %v695, -1e+30
        %v704 = vsel %vm564, %v700, -1e+30
        %vm705 = vcmp.ge.f32.partialorder %v703, 0.0
        %vm706 = vcmp.ge.f32.partialorder %v704, 0.0
        %v707 = vmul.f32 %v703, 0.2
        %v708 = vmul.f32 %v704, 0.2
        %v709 = vsel %vm705, %v703, %v707
        %v710 = vsel %vm706, %v704, %v708
        %v711 = vsel %vm573, %v709, -inf
        %712 = vmax.xlane.f32.xlu0 %v711
        %v713 = vpop.xlane.xlu0 %712
        %v714 = vsel %vm573, %v710, -inf
        %715 = vmax.xlane.f32.xlu0 %v714
        %v716 = vpop.xlane.xlu0 %715
        %v717 = vsub.f32 %v709, %v713
        %v718 = vsub.f32 %v710, %v716
        %v719 = vmul.f32 %v717, 1.442695
        %v720 = vpow.pop %v719
        %v721 = vmul.f32 %v718, 1.442695
        %v722 = vpow.pop %v721
        %v723 = vsel %vm573, %v720, 0.0
        %724 = vadd.xlane.f32.xlu0 %v723
        %v725 = vpop.xlane.xlu0 %724
        %v726 = vsel %vm573, %v722, 0.0
        %727 = vadd.xlane.f32.xlu0 %v726
        %v728 = vpop.xlane.xlu0 %727
        %v729 = vrcp.pop %v725
        %v730 = vrcp.pop %v728
        %v731 = vmul.f32 %v725, %v729
        %v732 = vmul.f32 %v728, %v730
        %v733 = vsub.f32 2.0, %v731
        %v734 = vsub.f32 2.0, %v732
        %v735 = vmul.f32 %v729, %v733
        %v736 = vmul.f32 %v730, %v734
        %v737 = vmul.f32 %v720, %v735
        %v738 = vmul.f32 %v722, %v736
        %739 = vrot.lane.b32.xlu0 %v611, 64
        %v740 = vpop.permute.xlu0 %739
        %v742 = vmul.f32 %v430, %v740
        %v743 = vmul.f32 %v435, %v740
        %746 = vrot.lane.b32.xlu0 %v742, 64
        %v747 = vpop.permute.xlu0 %746
        %748 = vrot.lane.b32.xlu0 %v743, 64
        %v749 = vpop.permute.xlu0 %748
        %v753 = vsel %vm573, %v737, 0
        %v756 = vsel %vm573, %v738, 0
        %758 = vmatprep.subr.mxu0 0.0
        %759 = vmatpush1.msra.mxu0 0.0
        %760 = vmatprep.subr.mxu0 0.0
        %761 = vmatpush1.msra.mxu0 0.0
        %762 = vmatprep.subr.mxu0 0.0
        %763 = vmatpush1.msra.mxu0 0.0
        %764 = vmatprep.subr.mxu0 0.0
        %765 = vmatpush1.msra.mxu0 0.0
        %766 = vmatprep.subr.mxu0 0.0
        %767 = vmatpush1.msra.mxu0 0.0
        %768 = vmatprep.subr.mxu0 0.0
        %769 = vmatpush1.msra.mxu0 0.0
        %770 = vmatprep.subr.mxu0 0.0
        %771 = vmatpush1.msra.mxu0 0.0
        %772 = vmatprep.subr.mxu0 0.0
        %773 = vmatpush1.msra.mxu0 0.0
        %774 = vmatprep.subr.mxu0 0.0
        %775 = vmatpush1.msra.mxu0 0.0
        %776 = vmatprep.subr.mxu0 0.0
        %777 = vmatpush1.msra.mxu0 0.0
        %778 = vmatprep.subr.mxu0 0.0
        %779 = vmatpush1.msra.mxu0 0.0
        %780 = vmatprep.subr.mxu0 0.0
        %781 = vmatpush1.msra.mxu0 0.0
        %782 = vmatprep.subr.mxu0 0.0
        %783 = vmatpush1.msra.mxu0 0.0
        %784 = vmatprep.subr.mxu0 0.0
        %785 = vmatpush1.msra.mxu0 0.0
        %786 = vmatprep.subr.mxu0 0.0
        %787 = vmatpush1.msra.mxu0 %v749
        %788 = vmatprep.subr.mxu0 0.0
        %789 = vmatpush1.msra.mxu0 %v747
        %790 = vmatprep.subr.mxu0 0.0
        %791 = vmatpush2.msra.mxu0 0.0
        %792 = vmatprep.subr.mxu0 0.0
        %793 = vmatpush2.msra.mxu0 0.0
        %794 = vmatprep.subr.mxu0 0.0
        %795 = vmatpush2.msra.mxu0 0.0
        %796 = vmatprep.subr.mxu0 0.0
        %797 = vmatpush2.msra.mxu0 0.0
        %798 = vmatprep.subr.mxu0 0.0
        %799 = vmatpush2.msra.mxu0 0.0
        %800 = vmatprep.subr.mxu0 0.0
        %801 = vmatpush2.msra.mxu0 0.0
        %802 = vmatprep.subr.mxu0 0.0
        %803 = vmatpush2.msra.mxu0 0.0
        %804 = vmatprep.subr.mxu0 0.0
        %805 = vmatpush2.msra.mxu0 0.0
        %806 = vmatprep.subr.mxu0 0.0
        %807 = vmatpush2.msra.mxu0 0.0
        %808 = vmatprep.subr.mxu0 0.0
        %809 = vmatpush2.msra.mxu0 0.0
        %810 = vmatprep.subr.mxu0 0.0
        %811 = vmatpush2.msra.mxu0 0.0
        %812 = vmatprep.subr.mxu0 0.0
        %813 = vmatpush2.msra.mxu0 0.0
        %814 = vmatprep.subr.mxu0 0.0
        %815 = vmatpush2.msra.mxu0 0.0
        %816 = vmatprep.subr.mxu0 0.0
        %817 = vmatpush2.msra.mxu0 0.0
        %818 = vmatprep.subr.mxu0 0.0
        %819 = vmatpush2.msra.mxu0 0.0
        %820 = vmatprep.subr.mxu0 0.0
        %821 = vmatpush2.msra.mxu0 0.0
        %822 = vmatprep.mubr.f32.mxu0 0.0
        %823 = vmatmul.mubr.f32.gmra.mxu0 %v753
        %v824 = vpop.f32.mrf.mxu0
        %v825 = vadd.f32 0.0, %v824
        %v826 = vpop.f32.mrf.mxu0
        %827 = vmatprep.mubr.f32.mxu0 0.0
        %828 = vmatmul.mubr.f32.gmra.mxu0 %v756
        %v829 = vpop.f32.mrf.mxu0
        %v830 = vadd.f32 0.0, %v829
        %v831 = vpop.f32.mrf.mxu0
        %832 = vdwg.mxu0
        %835 = vrot.lane.b32.xlu0 %v605, 64
        %v836 = vpop.permute.xlu0 %835
        %837 = vrot.lane.b32.xlu0 %v606, 64
        %v838 = vpop.permute.xlu0 %837
        %v842 = vsel %vm573, %v600, 0
        %v845 = vsel %vm573, %v601, 0
        %847 = vmatprep.subr.mxu0 0.0
        %848 = vmatpush1.msra.mxu0 0.0
        %849 = vmatprep.subr.mxu0 0.0
        %850 = vmatpush1.msra.mxu0 0.0
        %851 = vmatprep.subr.mxu0 0.0
        %852 = vmatpush1.msra.mxu0 0.0
        %853 = vmatprep.subr.mxu0 0.0
        %854 = vmatpush1.msra.mxu0 0.0
        %855 = vmatprep.subr.mxu0 0.0
        %856 = vmatpush1.msra.mxu0 0.0
        %857 = vmatprep.subr.mxu0 0.0
        %858 = vmatpush1.msra.mxu0 0.0
        %859 = vmatprep.subr.mxu0 0.0
        %860 = vmatpush1.msra.mxu0 0.0
        %861 = vmatprep.subr.mxu0 0.0
        %862 = vmatpush1.msra.mxu0 0.0
        %863 = vmatprep.subr.mxu0 0.0
        %864 = vmatpush1.msra.mxu0 0.0
        %865 = vmatprep.subr.mxu0 0.0
        %866 = vmatpush1.msra.mxu0 0.0
        %867 = vmatprep.subr.mxu0 0.0
        %868 = vmatpush1.msra.mxu0 0.0
        %869 = vmatprep.subr.mxu0 0.0
        %870 = vmatpush1.msra.mxu0 0.0
        %871 = vmatprep.subr.mxu0 0.0
        %872 = vmatpush1.msra.mxu0 0.0
        %873 = vmatprep.subr.mxu0 0.0
        %874 = vmatpush1.msra.mxu0 0.0
        %875 = vmatprep.subr.mxu0 0.0
        %876 = vmatpush1.msra.mxu0 %v838
        %877 = vmatprep.subr.mxu0 0.0
        %878 = vmatpush1.msra.mxu0 %v836
        %879 = vmatprep.subr.mxu0 0.0
        %880 = vmatpush2.msra.mxu0 0.0
        %881 = vmatprep.subr.mxu0 0.0
        %882 = vmatpush2.msra.mxu0 0.0
        %883 = vmatprep.subr.mxu0 0.0
        %884 = vmatpush2.msra.mxu0 0.0
        %885 = vmatprep.subr.mxu0 0.0
        %886 = vmatpush2.msra.mxu0 0.0
        %887 = vmatprep.subr.mxu0 0.0
        %888 = vmatpush2.msra.mxu0 0.0
        %889 = vmatprep.subr.mxu0 0.0
        %890 = vmatpush2.msra.mxu0 0.0
        %891 = vmatprep.subr.mxu0 0.0
        %892 = vmatpush2.msra.mxu0 0.0
        %893 = vmatprep.subr.mxu0 0.0
        %894 = vmatpush2.msra.mxu0 0.0
        %895 = vmatprep.subr.mxu0 0.0
        %896 = vmatpush2.msra.mxu0 0.0
        %897 = vmatprep.subr.mxu0 0.0
        %898 = vmatpush2.msra.mxu0 0.0
        %899 = vmatprep.subr.mxu0 0.0
        %900 = vmatpush2.msra.mxu0 0.0
        %901 = vmatprep.subr.mxu0 0.0
        %902 = vmatpush2.msra.mxu0 0.0
        %903 = vmatprep.subr.mxu0 0.0
        %904 = vmatpush2.msra.mxu0 0.0
        %905 = vmatprep.subr.mxu0 0.0
        %906 = vmatpush2.msra.mxu0 0.0
        %907 = vmatprep.subr.mxu0 0.0
        %908 = vmatpush2.msra.mxu0 0.0
        %909 = vmatprep.subr.mxu0 0.0
        %910 = vmatpush2.msra.mxu0 0.0
        %911 = vmatprep.mubr.f32.mxu0 0.0
        %912 = vmatmul.mubr.f32.gmra.mxu0 %v842
        %v913 = vpop.f32.mrf.mxu0
        %v914 = vadd.f32 %v825, %v913
        %v915 = vpop.f32.mrf.mxu0
        %916 = vmatprep.mubr.f32.mxu0 0.0
        %917 = vmatmul.mubr.f32.gmra.mxu0 %v845
        %v918 = vpop.f32.mrf.mxu0
        %v919 = vadd.f32 %v830, %v918
        %v920 = vpop.f32.mrf.mxu0
        %921 = vdwg.mxu0
        %vm922 = vcmp.ge.s32.totalorder %v442, 16
        %vm923 = vcmp.lt.s32.totalorder %v442, 24
        %vm924 = vmand %vm922, %vm923
        %v925 = vsel %vm924, 1, 0
        %v926 = vcvt.s32.f32 %v925
        %928 = vrot.lane.b32.xlu0 %v926, 32
        %v929 = vpop.permute.xlu0 %928
        %v931 = vmul.f32 %v430, %v929
        %v932 = vmul.f32 %v435, %v929
        %935 = vrot.lane.b32.xlu0 %v931, 96
        %v936 = vpop.permute.xlu0 %935
        %937 = vrot.lane.b32.xlu0 %v932, 96
        %v938 = vpop.permute.xlu0 %937
        %v939 = vsel %vm356, %v936, 0
        %v941 = vsel %vm356, %v938, 0
        %943 = vmatprep.subr.mxu0 0.0
        %944 = vmatpush1.xpose.msra.mxu0 0.0
        %945 = vmatprep.subr.mxu0 0.0
        %946 = vmatpush1.xpose.msra.mxu0 0.0
        %947 = vmatprep.subr.mxu0 0.0
        %948 = vmatpush1.xpose.msra.mxu0 0.0
        %949 = vmatprep.subr.mxu0 0.0
        %950 = vmatpush1.xpose.msra.mxu0 0.0
        %951 = vmatprep.subr.mxu0 0.0
        %952 = vmatpush1.xpose.msra.mxu0 0.0
        %953 = vmatprep.subr.mxu0 0.0
        %954 = vmatpush1.xpose.msra.mxu0 0.0
        %955 = vmatprep.subr.mxu0 0.0
        %956 = vmatpush1.xpose.msra.mxu0 0.0
        %957 = vmatprep.subr.mxu0 0.0
        %958 = vmatpush1.xpose.msra.mxu0 0.0
        %959 = vmatprep.subr.mxu0 0.0
        %960 = vmatpush1.xpose.msra.mxu0 0.0
        %961 = vmatprep.subr.mxu0 0.0
        %962 = vmatpush1.xpose.msra.mxu0 0.0
        %963 = vmatprep.subr.mxu0 0.0
        %964 = vmatpush1.xpose.msra.mxu0 0.0
        %965 = vmatprep.subr.mxu0 0.0
        %966 = vmatpush1.xpose.msra.mxu0 0.0
        %967 = vmatprep.subr.mxu0 0.0
        %968 = vmatpush1.xpose.msra.mxu0 0.0
        %969 = vmatprep.subr.mxu0 0.0
        %970 = vmatpush1.xpose.msra.mxu0 0.0
        %971 = vmatprep.subr.mxu0 0.0
        %972 = vmatpush1.xpose.msra.mxu0 %v941
        %973 = vmatprep.subr.mxu0 0.0
        %974 = vmatpush1.xpose.msra.mxu0 %v939
        %975 = vmatprep.subr.mxu0 0.0
        %976 = vmatpush2.xpose.msra.mxu0 0.0
        %977 = vmatprep.subr.mxu0 0.0
        %978 = vmatpush2.xpose.msra.mxu0 0.0
        %979 = vmatprep.subr.mxu0 0.0
        %980 = vmatpush2.xpose.msra.mxu0 0.0
        %981 = vmatprep.subr.mxu0 0.0
        %982 = vmatpush2.xpose.msra.mxu0 0.0
        %983 = vmatprep.subr.mxu0 0.0
        %984 = vmatpush2.xpose.msra.mxu0 0.0
        %985 = vmatprep.subr.mxu0 0.0
        %986 = vmatpush2.xpose.msra.mxu0 0.0
        %987 = vmatprep.subr.mxu0 0.0
        %988 = vmatpush2.xpose.msra.mxu0 0.0
        %989 = vmatprep.subr.mxu0 0.0
        %990 = vmatpush2.xpose.msra.mxu0 0.0
        %991 = vmatprep.subr.mxu0 0.0
        %992 = vmatpush2.xpose.msra.mxu0 0.0
        %993 = vmatprep.subr.mxu0 0.0
        %994 = vmatpush2.xpose.msra.mxu0 0.0
        %995 = vmatprep.subr.mxu0 0.0
        %996 = vmatpush2.xpose.msra.mxu0 0.0
        %997 = vmatprep.subr.mxu0 0.0
        %998 = vmatpush2.xpose.msra.mxu0 0.0
        %999 = vmatprep.subr.mxu0 0.0
        %1000 = vmatpush2.xpose.msra.mxu0 0.0
        %1001 = vmatprep.subr.mxu0 0.0
        %1002 = vmatpush2.xpose.msra.mxu0 0.0
        %1003 = vmatprep.subr.mxu0 0.0
        %1004 = vmatpush2.xpose.msra.mxu0 0.0
        %1005 = vmatprep.subr.mxu0 0.0
        %1006 = vmatpush2.xpose.msra.mxu0 0.0
        %1007 = vmatprep.mubr.f32.mxu0 0.0
        %1008 = vmatmul.mubr.f32.gmra.mxu0 %v475
        %v1009 = vpop.f32.mrf.mxu0
        %v1010 = vadd.f32 0.0, %v1009
        %v1011 = vpop.f32.mrf.mxu0
        %1012 = vmatprep.mubr.f32.mxu0 0.0
        %1013 = vmatmul.mubr.f32.gmra.mxu0 %v478
        %v1014 = vpop.f32.mrf.mxu0
        %v1015 = vadd.f32 0.0, %v1014
        %v1016 = vpop.f32.mrf.mxu0
        %1017 = vdwg.mxu0
        %v1018 = vsel %vm563, %v1010, -1e+30
        %v1019 = vsel %vm564, %v1015, -1e+30
        %vm1020 = vcmp.ge.f32.partialorder %v1018, 0.0
        %vm1021 = vcmp.ge.f32.partialorder %v1019, 0.0
        %v1022 = vmul.f32 %v1018, 0.2
        %v1023 = vmul.f32 %v1019, 0.2
        %v1024 = vsel %vm1020, %v1018, %v1022
        %v1025 = vsel %vm1021, %v1019, %v1023
        %v1026 = vsel %vm573, %v1024, -inf
        %1027 = vmax.xlane.f32.xlu0 %v1026
        %v1028 = vpop.xlane.xlu0 %1027
        %v1029 = vsel %vm573, %v1025, -inf
        %1030 = vmax.xlane.f32.xlu0 %v1029
        %v1031 = vpop.xlane.xlu0 %1030
        %v1032 = vsub.f32 %v1024, %v1028
        %v1033 = vsub.f32 %v1025, %v1031
        %v1034 = vmul.f32 %v1032, 1.442695
        %v1035 = vpow.pop %v1034
        %v1036 = vmul.f32 %v1033, 1.442695
        %v1037 = vpow.pop %v1036
        %v1038 = vsel %vm573, %v1035, 0.0
        %1039 = vadd.xlane.f32.xlu0 %v1038
        %v1040 = vpop.xlane.xlu0 %1039
        %v1041 = vsel %vm573, %v1037, 0.0
        %1042 = vadd.xlane.f32.xlu0 %v1041
        %v1043 = vpop.xlane.xlu0 %1042
        %v1044 = vrcp.pop %v1040
        %v1045 = vrcp.pop %v1043
        %v1046 = vmul.f32 %v1040, %v1044
        %v1047 = vmul.f32 %v1043, %v1045
        %v1048 = vsub.f32 2.0, %v1046
        %v1049 = vsub.f32 2.0, %v1047
        %v1050 = vmul.f32 %v1044, %v1048
        %v1051 = vmul.f32 %v1045, %v1049
        %v1052 = vmul.f32 %v1035, %v1050
        %v1053 = vmul.f32 %v1037, %v1051
        %1054 = vrot.lane.b32.xlu0 %v926, 64
        %v1055 = vpop.permute.xlu0 %1054
        %v1057 = vmul.f32 %v430, %v1055
        %v1058 = vmul.f32 %v435, %v1055
        %1061 = vrot.lane.b32.xlu0 %v1057, 64
        %v1062 = vpop.permute.xlu0 %1061
        %1063 = vrot.lane.b32.xlu0 %v1058, 64
        %v1064 = vpop.permute.xlu0 %1063
        %v1068 = vsel %vm573, %v1052, 0
        %v1071 = vsel %vm573, %v1053, 0
        %1073 = vmatprep.subr.mxu0 0.0
        %1074 = vmatpush1.msra.mxu0 0.0
        %1075 = vmatprep.subr.mxu0 0.0
        %1076 = vmatpush1.msra.mxu0 0.0
        %1077 = vmatprep.subr.mxu0 0.0
        %1078 = vmatpush1.msra.mxu0 0.0
        %1079 = vmatprep.subr.mxu0 0.0
        %1080 = vmatpush1.msra.mxu0 0.0
        %1081 = vmatprep.subr.mxu0 0.0
        %1082 = vmatpush1.msra.mxu0 0.0
        %1083 = vmatprep.subr.mxu0 0.0
        %1084 = vmatpush1.msra.mxu0 0.0
        %1085 = vmatprep.subr.mxu0 0.0
        %1086 = vmatpush1.msra.mxu0 0.0
        %1087 = vmatprep.subr.mxu0 0.0
        %1088 = vmatpush1.msra.mxu0 0.0
        %1089 = vmatprep.subr.mxu0 0.0
        %1090 = vmatpush1.msra.mxu0 0.0
        %1091 = vmatprep.subr.mxu0 0.0
        %1092 = vmatpush1.msra.mxu0 0.0
        %1093 = vmatprep.subr.mxu0 0.0
        %1094 = vmatpush1.msra.mxu0 0.0
        %1095 = vmatprep.subr.mxu0 0.0
        %1096 = vmatpush1.msra.mxu0 0.0
        %1097 = vmatprep.subr.mxu0 0.0
        %1098 = vmatpush1.msra.mxu0 0.0
        %1099 = vmatprep.subr.mxu0 0.0
        %1100 = vmatpush1.msra.mxu0 0.0
        %1101 = vmatprep.subr.mxu0 0.0
        %1102 = vmatpush1.msra.mxu0 %v1064
        %1103 = vmatprep.subr.mxu0 0.0
        %1104 = vmatpush1.msra.mxu0 %v1062
        %1105 = vmatprep.subr.mxu0 0.0
        %1106 = vmatpush2.msra.mxu0 0.0
        %1107 = vmatprep.subr.mxu0 0.0
        %1108 = vmatpush2.msra.mxu0 0.0
        %1109 = vmatprep.subr.mxu0 0.0
        %1110 = vmatpush2.msra.mxu0 0.0
        %1111 = vmatprep.subr.mxu0 0.0
        %1112 = vmatpush2.msra.mxu0 0.0
        %1113 = vmatprep.subr.mxu0 0.0
        %1114 = vmatpush2.msra.mxu0 0.0
        %1115 = vmatprep.subr.mxu0 0.0
        %1116 = vmatpush2.msra.mxu0 0.0
        %1117 = vmatprep.subr.mxu0 0.0
        %1118 = vmatpush2.msra.mxu0 0.0
        %1119 = vmatprep.subr.mxu0 0.0
        %1120 = vmatpush2.msra.mxu0 0.0
        %1121 = vmatprep.subr.mxu0 0.0
        %1122 = vmatpush2.msra.mxu0 0.0
        %1123 = vmatprep.subr.mxu0 0.0
        %1124 = vmatpush2.msra.mxu0 0.0
        %1125 = vmatprep.subr.mxu0 0.0
        %1126 = vmatpush2.msra.mxu0 0.0
        %1127 = vmatprep.subr.mxu0 0.0
        %1128 = vmatpush2.msra.mxu0 0.0
        %1129 = vmatprep.subr.mxu0 0.0
        %1130 = vmatpush2.msra.mxu0 0.0
        %1131 = vmatprep.subr.mxu0 0.0
        %1132 = vmatpush2.msra.mxu0 0.0
        %1133 = vmatprep.subr.mxu0 0.0
        %1134 = vmatpush2.msra.mxu0 0.0
        %1135 = vmatprep.subr.mxu0 0.0
        %1136 = vmatpush2.msra.mxu0 0.0
        %1137 = vmatprep.mubr.f32.mxu0 0.0
        %1138 = vmatmul.mubr.f32.gmra.mxu0 %v1068
        %v1139 = vpop.f32.mrf.mxu0
        %v1140 = vadd.f32 0.0, %v1139
        %v1141 = vpop.f32.mrf.mxu0
        %1142 = vmatprep.mubr.f32.mxu0 0.0
        %1143 = vmatmul.mubr.f32.gmra.mxu0 %v1071
        %v1144 = vpop.f32.mrf.mxu0
        %v1145 = vadd.f32 0.0, %v1144
        %v1146 = vpop.f32.mrf.mxu0
        %1147 = vdwg.mxu0
        %v1148 = vadd.f32 %v914, %v1140
        %v1149 = vadd.f32 %v919, %v1145
        %vm1150 = vcmp.ge.s32.totalorder %v442, 24
        %vm1151 = vcmp.lt.s32.totalorder %v442, 32
        %vm1152 = vmand %vm1150, %vm1151
        %v1153 = vsel %vm1152, 1, 0
        %v1154 = vcvt.s32.f32 %v1153
        %1156 = vrot.lane.b32.xlu0 %v1154, 32
        %v1157 = vpop.permute.xlu0 %1156
        %v1159 = vmul.f32 %v430, %v1157
        %v1160 = vmul.f32 %v435, %v1157
        %1163 = vrot.lane.b32.xlu0 %v1159, 96
        %v1164 = vpop.permute.xlu0 %1163
        %1165 = vrot.lane.b32.xlu0 %v1160, 96
        %v1166 = vpop.permute.xlu0 %1165
        %v1167 = vsel %vm356, %v1164, 0
        %v1169 = vsel %vm356, %v1166, 0
        %1171 = vmatprep.subr.mxu0 0.0
        %1172 = vmatpush1.xpose.msra.mxu0 0.0
        %1173 = vmatprep.subr.mxu0 0.0
        %1174 = vmatpush1.xpose.msra.mxu0 0.0
        %1175 = vmatprep.subr.mxu0 0.0
        %1176 = vmatpush1.xpose.msra.mxu0 0.0
        %1177 = vmatprep.subr.mxu0 0.0
        %1178 = vmatpush1.xpose.msra.mxu0 0.0
        %1179 = vmatprep.subr.mxu0 0.0
        %1180 = vmatpush1.xpose.msra.mxu0 0.0
        %1181 = vmatprep.subr.mxu0 0.0
        %1182 = vmatpush1.xpose.msra.mxu0 0.0
        %1183 = vmatprep.subr.mxu0 0.0
        %1184 = vmatpush1.xpose.msra.mxu0 0.0
        %1185 = vmatprep.subr.mxu0 0.0
        %1186 = vmatpush1.xpose.msra.mxu0 0.0
        %1187 = vmatprep.subr.mxu0 0.0
        %1188 = vmatpush1.xpose.msra.mxu0 0.0
        %1189 = vmatprep.subr.mxu0 0.0
        %1190 = vmatpush1.xpose.msra.mxu0 0.0
        %1191 = vmatprep.subr.mxu0 0.0
        %1192 = vmatpush1.xpose.msra.mxu0 0.0
        %1193 = vmatprep.subr.mxu0 0.0
        %1194 = vmatpush1.xpose.msra.mxu0 0.0
        %1195 = vmatprep.subr.mxu0 0.0
        %1196 = vmatpush1.xpose.msra.mxu0 0.0
        %1197 = vmatprep.subr.mxu0 0.0
        %1198 = vmatpush1.xpose.msra.mxu0 0.0
        %1199 = vmatprep.subr.mxu0 0.0
        %1200 = vmatpush1.xpose.msra.mxu0 %v1169
        %1201 = vmatprep.subr.mxu0 0.0
        %1202 = vmatpush1.xpose.msra.mxu0 %v1167
        %1203 = vmatprep.subr.mxu0 0.0
        %1204 = vmatpush2.xpose.msra.mxu0 0.0
        %1205 = vmatprep.subr.mxu0 0.0
        %1206 = vmatpush2.xpose.msra.mxu0 0.0
        %1207 = vmatprep.subr.mxu0 0.0
        %1208 = vmatpush2.xpose.msra.mxu0 0.0
        %1209 = vmatprep.subr.mxu0 0.0
        %1210 = vmatpush2.xpose.msra.mxu0 0.0
        %1211 = vmatprep.subr.mxu0 0.0
        %1212 = vmatpush2.xpose.msra.mxu0 0.0
        %1213 = vmatprep.subr.mxu0 0.0
        %1214 = vmatpush2.xpose.msra.mxu0 0.0
        %1215 = vmatprep.subr.mxu0 0.0
        %1216 = vmatpush2.xpose.msra.mxu0 0.0
        %1217 = vmatprep.subr.mxu0 0.0
        %1218 = vmatpush2.xpose.msra.mxu0 0.0
        %1219 = vmatprep.subr.mxu0 0.0
        %1220 = vmatpush2.xpose.msra.mxu0 0.0
        %1221 = vmatprep.subr.mxu0 0.0
        %1222 = vmatpush2.xpose.msra.mxu0 0.0
        %1223 = vmatprep.subr.mxu0 0.0
        %1224 = vmatpush2.xpose.msra.mxu0 0.0
        %1225 = vmatprep.subr.mxu0 0.0
        %1226 = vmatpush2.xpose.msra.mxu0 0.0
        %1227 = vmatprep.subr.mxu0 0.0
        %1228 = vmatpush2.xpose.msra.mxu0 0.0
        %1229 = vmatprep.subr.mxu0 0.0
        %1230 = vmatpush2.xpose.msra.mxu0 0.0
        %1231 = vmatprep.subr.mxu0 0.0
        %1232 = vmatpush2.xpose.msra.mxu0 0.0
        %1233 = vmatprep.subr.mxu0 0.0
        %1234 = vmatpush2.xpose.msra.mxu0 0.0
        %1235 = vmatprep.mubr.f32.mxu0 0.0
        %1236 = vmatmul.mubr.f32.gmra.mxu0 %v475
        %v1237 = vpop.f32.mrf.mxu0
        %v1238 = vadd.f32 0.0, %v1237
        %v1239 = vpop.f32.mrf.mxu0
        %1240 = vmatprep.mubr.f32.mxu0 0.0
        %1241 = vmatmul.mubr.f32.gmra.mxu0 %v478
        %v1242 = vpop.f32.mrf.mxu0
        %v1243 = vadd.f32 0.0, %v1242
        %v1244 = vpop.f32.mrf.mxu0
        %1245 = vdwg.mxu0
        %v1246 = vsel %vm563, %v1238, -1e+30
        %v1247 = vsel %vm564, %v1243, -1e+30
        %vm1248 = vcmp.ge.f32.partialorder %v1246, 0.0
        %vm1249 = vcmp.ge.f32.partialorder %v1247, 0.0
        %v1250 = vmul.f32 %v1246, 0.2
        %v1251 = vmul.f32 %v1247, 0.2
        %v1252 = vsel %vm1248, %v1246, %v1250
        %v1253 = vsel %vm1249, %v1247, %v1251
        %v1254 = vsel %vm573, %v1252, -inf
        %1255 = vmax.xlane.f32.xlu0 %v1254
        %v1256 = vpop.xlane.xlu0 %1255
        %v1257 = vsel %vm573, %v1253, -inf
        %1258 = vmax.xlane.f32.xlu0 %v1257
        %v1259 = vpop.xlane.xlu0 %1258
        %v1260 = vsub.f32 %v1252, %v1256
        %v1261 = vsub.f32 %v1253, %v1259
        %v1262 = vmul.f32 %v1260, 1.442695
        %v1263 = vpow.pop %v1262
        %v1264 = vmul.f32 %v1261, 1.442695
        %v1265 = vpow.pop %v1264
        %v1266 = vsel %vm573, %v1263, 0.0
        %1267 = vadd.xlane.f32.xlu0 %v1266
        %v1268 = vpop.xlane.xlu0 %1267
        %v1269 = vsel %vm573, %v1265, 0.0
        %1270 = vadd.xlane.f32.xlu0 %v1269
        %v1271 = vpop.xlane.xlu0 %1270
        %v1272 = vrcp.pop %v1268
        %v1273 = vrcp.pop %v1271
        %v1274 = vmul.f32 %v1268, %v1272
        %v1275 = vmul.f32 %v1271, %v1273
        %v1276 = vsub.f32 2.0, %v1274
        %v1277 = vsub.f32 2.0, %v1275
        %v1278 = vmul.f32 %v1272, %v1276
        %v1279 = vmul.f32 %v1273, %v1277
        %v1280 = vmul.f32 %v1263, %v1278
        %v1281 = vmul.f32 %v1265, %v1279
        %1282 = vrot.lane.b32.xlu0 %v1154, 64
        %v1283 = vpop.permute.xlu0 %1282
        %v1285 = vmul.f32 %v430, %v1283
        %v1286 = vmul.f32 %v435, %v1283
        %1289 = vrot.lane.b32.xlu0 %v1285, 64
        %v1290 = vpop.permute.xlu0 %1289
        %1291 = vrot.lane.b32.xlu0 %v1286, 64
        %v1292 = vpop.permute.xlu0 %1291
        %v1296 = vsel %vm573, %v1280, 0
        %v1299 = vsel %vm573, %v1281, 0
        %1301 = vmatprep.subr.mxu0 0.0
        %1302 = vmatpush1.msra.mxu0 0.0
        %1303 = vmatprep.subr.mxu0 0.0
        %1304 = vmatpush1.msra.mxu0 0.0
        %1305 = vmatprep.subr.mxu0 0.0
        %1306 = vmatpush1.msra.mxu0 0.0
        %1307 = vmatprep.subr.mxu0 0.0
        %1308 = vmatpush1.msra.mxu0 0.0
        %1309 = vmatprep.subr.mxu0 0.0
        %1310 = vmatpush1.msra.mxu0 0.0
        %1311 = vmatprep.subr.mxu0 0.0
        %1312 = vmatpush1.msra.mxu0 0.0
        %1313 = vmatprep.subr.mxu0 0.0
        %1314 = vmatpush1.msra.mxu0 0.0
        %1315 = vmatprep.subr.mxu0 0.0
        %1316 = vmatpush1.msra.mxu0 0.0
        %1317 = vmatprep.subr.mxu0 0.0
        %1318 = vmatpush1.msra.mxu0 0.0
        %1319 = vmatprep.subr.mxu0 0.0
        %1320 = vmatpush1.msra.mxu0 0.0
        %1321 = vmatprep.subr.mxu0 0.0
        %1322 = vmatpush1.msra.mxu0 0.0
        %1323 = vmatprep.subr.mxu0 0.0
        %1324 = vmatpush1.msra.mxu0 0.0
        %1325 = vmatprep.subr.mxu0 0.0
        %1326 = vmatpush1.msra.mxu0 0.0
        %1327 = vmatprep.subr.mxu0 0.0
        %1328 = vmatpush1.msra.mxu0 0.0
        %1329 = vmatprep.subr.mxu0 0.0
        %1330 = vmatpush1.msra.mxu0 %v1292
        %1331 = vmatprep.subr.mxu0 0.0
        %1332 = vmatpush1.msra.mxu0 %v1290
        %1333 = vmatprep.subr.mxu0 0.0
        %1334 = vmatpush2.msra.mxu0 0.0
        %1335 = vmatprep.subr.mxu0 0.0
        %1336 = vmatpush2.msra.mxu0 0.0
        %1337 = vmatprep.subr.mxu0 0.0
        %1338 = vmatpush2.msra.mxu0 0.0
        %1339 = vmatprep.subr.mxu0 0.0
        %1340 = vmatpush2.msra.mxu0 0.0
        %1341 = vmatprep.subr.mxu0 0.0
        %1342 = vmatpush2.msra.mxu0 0.0
        %1343 = vmatprep.subr.mxu0 0.0
        %1344 = vmatpush2.msra.mxu0 0.0
        %1345 = vmatprep.subr.mxu0 0.0
        %1346 = vmatpush2.msra.mxu0 0.0
        %1347 = vmatprep.subr.mxu0 0.0
        %1348 = vmatpush2.msra.mxu0 0.0
        %1349 = vmatprep.subr.mxu0 0.0
        %1350 = vmatpush2.msra.mxu0 0.0
        %1351 = vmatprep.subr.mxu0 0.0
        %1352 = vmatpush2.msra.mxu0 0.0
        %1353 = vmatprep.subr.mxu0 0.0
        %1354 = vmatpush2.msra.mxu0 0.0
        %1355 = vmatprep.subr.mxu0 0.0
        %1356 = vmatpush2.msra.mxu0 0.0
        %1357 = vmatprep.subr.mxu0 0.0
        %1358 = vmatpush2.msra.mxu0 0.0
        %1359 = vmatprep.subr.mxu0 0.0
        %1360 = vmatpush2.msra.mxu0 0.0
        %1361 = vmatprep.subr.mxu0 0.0
        %1362 = vmatpush2.msra.mxu0 0.0
        %1363 = vmatprep.subr.mxu0 0.0
        %1364 = vmatpush2.msra.mxu0 0.0
        %1365 = vmatprep.mubr.f32.mxu0 0.0
        %1366 = vmatmul.mubr.f32.gmra.mxu0 %v1296
        %v1367 = vpop.f32.mrf.mxu0
        %v1368 = vadd.f32 0.0, %v1367
        %v1369 = vpop.f32.mrf.mxu0
        %1370 = vmatprep.mubr.f32.mxu0 0.0
        %1371 = vmatmul.mubr.f32.gmra.mxu0 %v1299
        %v1372 = vpop.f32.mrf.mxu0
        %v1373 = vadd.f32 0.0, %v1372
        %v1374 = vpop.f32.mrf.mxu0
        %1375 = vdwg.mxu0
        %v1376 = vadd.f32 %v1148, %v1368
        %v1377 = vadd.f32 %v1149, %v1373
        %v1378 = vld [vmem:[#allocation8] sm:$0xff]
        %v1379 = vld [vmem:[#allocation8 + $0x8] sm:$0xff]
        %v1380 = vld [vmem:[#allocation8 + $0x10] sm:$0xff]
        %v1381 = vld [vmem:[#allocation8 + $0x18] sm:$0xff]
        %v1382 = vld [vmem:[%s5] sm:$0x1]
        %v1384 = vlaneseq
        %v1385 = vshrl.u32 %v1384, 7
        %v1386 = vsub.s32 0, %v1385
        %v1387 = vrot.slane %v1382, %v1386
        %v1390 = vsel %vm356, %v1376, 0
        %v1393 = vsel %vm356, %v1377, 0
        %1395 = vmatprep.subr.mxu0 0.0
        %1396 = vmatpush1.msra.mxu0 0.0
        %1397 = vmatprep.subr.mxu0 0.0
        %1398 = vmatpush1.msra.mxu0 0.0
        %1399 = vmatprep.subr.mxu0 0.0
        %1400 = vmatpush1.msra.mxu0 0.0
        %1401 = vmatprep.subr.mxu0 0.0
        %1402 = vmatpush1.msra.mxu0 0.0
        %1403 = vmatprep.subr.mxu0 0.0
        %1404 = vmatpush1.msra.mxu0 0.0
        %1405 = vmatprep.subr.mxu0 0.0
        %1406 = vmatpush1.msra.mxu0 0.0
        %1407 = vmatprep.subr.mxu0 0.0
        %1408 = vmatpush1.msra.mxu0 0.0
        %1409 = vmatprep.subr.mxu0 0.0
        %1410 = vmatpush1.msra.mxu0 0.0
        %1411 = vmatprep.subr.mxu0 0.0
        %1412 = vmatpush1.msra.mxu0 0.0
        %1413 = vmatprep.subr.mxu0 0.0
        %1414 = vmatpush1.msra.mxu0 0.0
        %1415 = vmatprep.subr.mxu0 0.0
        %1416 = vmatpush1.msra.mxu0 0.0
        %1417 = vmatprep.subr.mxu0 0.0
        %1418 = vmatpush1.msra.mxu0 0.0
        %1419 = vmatprep.subr.mxu0 0.0
        %1420 = vmatpush1.msra.mxu0 %v1381
        %1421 = vmatprep.subr.mxu0 0.0
        %1422 = vmatpush1.msra.mxu0 %v1380
        %1423 = vmatprep.subr.mxu0 0.0
        %1424 = vmatpush1.msra.mxu0 %v1379
        %1425 = vmatprep.subr.mxu0 0.0
        %1426 = vmatpush1.msra.mxu0 %v1378
        %1427 = vmatprep.subr.mxu0 0.0
        %1428 = vmatpush2.msra.mxu0 0.0
        %1429 = vmatprep.subr.mxu0 0.0
        %1430 = vmatpush2.msra.mxu0 0.0
        %1431 = vmatprep.subr.mxu0 0.0
        %1432 = vmatpush2.msra.mxu0 0.0
        %1433 = vmatprep.subr.mxu0 0.0
        %1434 = vmatpush2.msra.mxu0 0.0
        %1435 = vmatprep.subr.mxu0 0.0
        %1436 = vmatpush2.msra.mxu0 0.0
        %1437 = vmatprep.subr.mxu0 0.0
        %1438 = vmatpush2.msra.mxu0 0.0
        %1439 = vmatprep.subr.mxu0 0.0
        %1440 = vmatpush2.msra.mxu0 0.0
        %1441 = vmatprep.subr.mxu0 0.0
        %1442 = vmatpush2.msra.mxu0 0.0
        %1443 = vmatprep.subr.mxu0 0.0
        %1444 = vmatpush2.msra.mxu0 0.0
        %1445 = vmatprep.subr.mxu0 0.0
        %1446 = vmatpush2.msra.mxu0 0.0
        %1447 = vmatprep.subr.mxu0 0.0
        %1448 = vmatpush2.msra.mxu0 0.0
        %1449 = vmatprep.subr.mxu0 0.0
        %1450 = vmatpush2.msra.mxu0 0.0
        %1451 = vmatprep.subr.mxu0 0.0
        %1452 = vmatpush2.msra.mxu0 0.0
        %1453 = vmatprep.subr.mxu0 0.0
        %1454 = vmatpush2.msra.mxu0 0.0
        %1455 = vmatprep.subr.mxu0 0.0
        %1456 = vmatpush2.msra.mxu0 0.0
        %1457 = vmatprep.subr.mxu0 0.0
        %1458 = vmatpush2.msra.mxu0 0.0
        %1459 = vmatprep.mubr.f32.mxu0 0.0
        %1460 = vmatmul.mubr.f32.gmra.mxu0 %v1390
        %v1461 = vpop.f32.mrf.mxu0
        %v1462 = vadd.f32 %v1387, %v1461
        %v1463 = vpop.f32.mrf.mxu0
        %1464 = vmatprep.mubr.f32.mxu0 0.0
        %1465 = vmatmul.mubr.f32.gmra.mxu0 %v1393
        %v1466 = vpop.f32.mrf.mxu0
        %v1467 = vadd.f32 %v1387, %v1466
        %v1468 = vpop.f32.mrf.mxu0
        %1469 = vdwg.mxu0
        %1470 = vst.msk [vmem:[%s338] sm:$0xff] %vm356, %v1462
        %1471 = vst.msk [vmem:[%s338 + $0x8] sm:$0xff] %vm356, %v1467
        %s1472 = sand.u32 %s171, 1
        %s1473 = scalar_lea.sflag [#allocation4], %s1472
        %s1474 = sand.u32 %s171, 1
        %s1475 = smul.addr %s1474, 16
        %s1476 = scalar_lea.vmem [#allocation10], %s1475
        // Predicated region
        $region61: #{tpu_custom_call.1} parent=43 // pred_check
          %p1477 = pneg %p181
        $region62: #{tpu_custom_call.1} parent=43 // pred_check_branch
          %1479 = sbr.rel (%p1477) target = $region64
        $region63: #{tpu_custom_call.1} parent=43 // pred_region
          %s1480 = smul.u32 2, %s27
          %s1482 = ssub.s32 256, 256
          %1483 = vsyncadd %s1473, %s1482
          %s1484 = smul.addr %s1480, 128
          %s1485 = scalar_lea.hbm %s6, %s1484
          %s1486 = sshll.u32 %s1476, 4
          %s1487 = int_to_ptr.vmem [resolvable:$true] %s1486
          %1492 = dma.vmem_to_hbm [thread:$0]  %s1487, 256, %s1485, %s1473, 128, 128, 8
        $region64: #{tpu_custom_call.1} parent=43 // pred_fallthru
          _
      $region44: #{tpu_custom_call.1} parent=5 // pred_fallthru
        _
      %p1493 = scmp.le.s32.totalorder 2, %s22
      // Predicated region
      $region65: #{tpu_custom_call.1} parent=5 // pred_check
        %p1494 = pneg %p1493
      $region66: #{tpu_custom_call.1} parent=5 // pred_check_branch
        %1496 = sbr.rel (%p1494) target = $region68
      $region67: #{tpu_custom_call.1} parent=5 // pred_region
        %s1497 = ssub.s32 %s22, 2
        // Predicated region
        $region69: #{tpu_custom_call.1} parent=67 // pred_check
          %p1498 = pneg %p187
        $region70: #{tpu_custom_call.1} parent=67 // pred_check_branch
          %1500 = sbr.rel (%p1498) target = $region72
        $region71: #{tpu_custom_call.1} parent=67 // pred_region
          %s1501 = sand.u32 %s172, 1
          %s1502 = scalar_lea.sflag [#allocation4], %s1501
          %s1503 = sand.u32 %s172, 1
          %s1504 = smul.addr %s1503, 16
          %s1505 = scalar_lea.vmem [#allocation10], %s1504
          %1506 = dma.done %s1502, 256
        $region72: #{tpu_custom_call.1} parent=67 // pred_fallthru
          _
      $region68: #{tpu_custom_call.1} parent=5 // pred_fallthru
        _
    $region6: #{tpu_custom_call.1} parent=1 // loop_footer
      %s26 = sadd.s32 1, %s22
    $region7: #{tpu_custom_call.1} parent=1 // loop_footer_branch
      %21 = sbr.rel target = $region3
    $region8: #{tpu_custom_call.1} parent=1 // loop_exit
      _
    %1507 = vsyncpa [#allocation3], 1
    %s1508 = scalar_lea.sflag [#allocation3], 1
    %1509 = vsyncpa %s1508, 1
    %1510 = vsyncpa [#allocation6], 1
    %s1511 = scalar_lea.sflag [#allocation6], 1
    %1512 = vsyncpa %s1511, 1
    %1513 = vsyncpa [#allocation9], 1
    %1514 = vsyncpa [#allocation4], 1
    %s1515 = scalar_lea.sflag [#allocation4], 1
    %1516 = vsyncpa %s1515, 1

</llo_original>
